<compile_context>
chip_gen: v6e
topology: v6e:2x2x1
jax: 0.10.0
libtpu: 0.0.40
codegen_flags: <defaults>
</compile_context>

<pallas_src>
import numpy as np
import jax
import jax.numpy as jnp
from jax import lax
from jax.experimental import pallas as pl
from jax.experimental.pallas import tpu as pltpu


# ---------------------------------------------------------------- kernel ----

def net_kernel(x_ref, t1_ref, b1_ref, sw1_ref, sh1_ref,
               t2_ref, b2_ref, sw2_ref, sh2_ref,
               wf1_ref, fb1_ref, wf2_ref, fb2_ref, o_ref):
    """Whole network for one image; every intermediate stays in VMEM/vregs.

    x_ref : (1, 28, 28)  one input image
    t1_ref: (5, 28, 48)  conv1 banded matrices (cols = co*24 + j)
    b1_ref: (1, 48)      conv1 bias, repeated per output column block
    sw1   : (2, 48, 24)  conv1-stage pool column selectors (even / odd)
    sh1   : (2, 12, 24)  conv1-stage pool row selectors    (even / odd)
    t2_ref: (5, 24, 40)  conv2 banded matrices (cols = co*8 + j)
    b2_ref: (1, 40)
    sw2   : (2, 40, 20), sh2: (2, 4, 8)
    wf1   : (20, 512)    fc1 weights, flatten-permuted, 128-aligned row blocks
    fb1   : (1, 50), wf2: (50, 10), fb2: (1, 10)
    o_ref : (1, 1, 10)
    """
    f32 = jnp.float32
    x = x_ref[0]                                                  # (28, 28)

    # ---- conv1 (5x5, 1->2): 5 banded matmuls over shifted row windows ----
    y1 = jnp.zeros((24, 48), f32)
    for kh in range(5):
        y1 = y1 + jnp.dot(x[kh:kh + 24, :], t1_ref[kh],
                          preferred_element_type=f32)             # (24, 48)
    a1 = jnp.maximum(y1 + b1_ref[...], 0.0)                       # relu(conv1+b)

    # ---- 2x2 maxpool: columns (even/odd select matmul) then rows ----
    aw = jnp.maximum(jnp.dot(a1, sw1_ref[0], preferred_element_type=f32),
                     jnp.dot(a1, sw1_ref[1], preferred_element_type=f32))  # (24, 24)
    p1 = jnp.maximum(jnp.dot(sh1_ref[0], aw, preferred_element_type=f32),
                     jnp.dot(sh1_ref[1], aw, preferred_element_type=f32))  # (12, 24)

    # ---- conv2 (5x5, 2->5) ----
    y2 = jnp.zeros((8, 40), f32)
    for kh in range(5):
        y2 = y2 + jnp.dot(p1[kh:kh + 8, :], t2_ref[kh],
                          preferred_element_type=f32)             # (8, 40)
    a2 = jnp.maximum(y2 + b2_ref[...], 0.0)

    bw = jnp.maximum(jnp.dot(a2, sw2_ref[0], preferred_element_type=f32),
                     jnp.dot(a2, sw2_ref[1], preferred_element_type=f32))  # (8, 20)
    z = jnp.maximum(jnp.dot(sh2_ref[0], bw, preferred_element_type=f32),
                    jnp.dot(sh2_ref[1], bw, preferred_element_type=f32))   # (4, 20)

    # ---- fc1 (NCHW flatten folded into wf1's 128-aligned column blocks) ----
    g = jnp.dot(z, wf1_ref[...], preferred_element_type=f32)      # (4, 512)
    h = (g[0:1, 0:50] + g[1:2, 128:178] +
         g[2:3, 256:306] + g[3:4, 384:434])                       # (1, 50)
    h = jnp.maximum(h + fb1_ref[...], 0.0)

    # ---- fc2 ----
    o_ref[0] = jnp.dot(h, wf2_ref[...], preferred_element_type=f32) + fb2_ref[...]


# -------------------------------------------- one-time parameter prep -------

def prepare_params(params):
    """Host-side numpy: fold im2col, pooling selection and the NCHW flatten
    permutation into constant matmul operands (one-time cost)."""
    f32 = np.float32
    w1 = np.asarray(params['conv1_w'], f32)   # (2, 1, 5, 5)
    b1 = np.asarray(params['conv1_b'], f32)   # (2,)
    w2 = np.asarray(params['conv2_w'], f32)   # (5, 2, 5, 5)
    b2 = np.asarray(params['conv2_b'], f32)   # (5,)
    fw1 = np.asarray(params['fc1_w'], f32)    # (50, 80)
    fb1 = np.asarray(params['fc1_b'], f32)    # (50,)
    fw2 = np.asarray(params['fc2_w'], f32)    # (10, 50)
    fb2 = np.asarray(params['fc2_b'], f32)    # (10,)

    # conv1: Y1[i, co*24+j] = sum_kh (X[kh:kh+24, :] @ t1[kh])[i, co*24+j]
    t1 = np.zeros((5, 28, 48), f32)
    j = np.arange(24)
    for kh in range(5):
        for co in range(2):
            for kw in range(5):
                t1[kh, j + kw, co * 24 + j] = w1[co, 0, kh, kw]
    b1row = np.repeat(b1, 24)[None, :]                            # (1, 48)

    # conv2: input columns are ci*12 + w'; output columns co*8 + j
    t2 = np.zeros((5, 24, 40), f32)
    j = np.arange(8)
    for kh in range(5):
        for co in range(5):
            for ci in range(2):
                for kw in range(5):
                    t2[kh, ci * 12 + j + kw, co * 8 + j] = w2[co, ci, kh, kw]
    b2row = np.repeat(b2, 8)[None, :]                             # (1, 40)

    # 2x2 maxpool selectors (even / odd columns, even / odd rows).
    sw1 = np.zeros((2, 48, 24), f32)
    sh1 = np.zeros((2, 12, 24), f32)
    q = np.arange(12)
    for d in range(2):
        for co in range(2):
            sw1[d, co * 24 + 2 * q + d, co * 12 + q] = 1.0
        sh1[d, q, 2 * q + d] = 1.0
    sw2 = np.zeros((2, 40, 20), f32)
    sh2 = np.zeros((2, 4, 8), f32)
    q = np.arange(4)
    for d in range(2):
        for co in range(5):
            sw2[d, co * 8 + 2 * q + d, co * 4 + q] = 1.0
        sh2[d, q, 2 * q + d] = 1.0

    # fc1: wf1[c*4+q, p*128+n] = fc1_w[n, c*16 + p*4 + q]  (NCHW flatten folded,
    # each pooled-row block p starts at a 128-aligned column).
    wf1 = np.zeros((20, 512), f32)
    blocks = fw1.reshape(50, 5, 4, 4).transpose(1, 3, 2, 0)       # (c, q, p, n)
    for p in range(4):
        wf1[:, p * 128:p * 128 + 50] = blocks[:, :, p, :].reshape(20, 50)

    prep = dict(t1=t1, b1=b1row, sw1=sw1, sh1=sh1,
                t2=t2, b2=b2row, sw2=sw2, sh2=sh2,
                wf1=wf1, fb1=fb1[None, :], wf2=fw2.T.copy(), fb2=fb2[None, :])
    return {k: jnp.asarray(v) for k, v in prep.items()}


# ----------------------------------------------------------------- wrapper --

def _const_spec(arr):
    nd = arr.ndim
    return pl.BlockSpec(arr.shape, lambda b, _nd=nd: (0,) * _nd)


_CONST_ORDER = ('t1', 'b1', 'sw1', 'sh1', 't2', 'b2', 'sw2', 'sh2',
                'wf1', 'fb1', 'wf2', 'fb2')


@jax.jit
def net_forward(x_nchw, prep):
    B = x_nchw.shape[0]
    x = x_nchw.reshape(B, 28, 28)                 # single input channel
    consts = [prep[k] for k in _CONST_ORDER]
    out = pl.pallas_call(
        net_kernel,
        out_shape=jax.ShapeDtypeStruct((B, 1, 10), jnp.float32),
        grid=(B,),
        in_specs=[pl.BlockSpec((1, 28, 28), lambda b: (b, 0, 0))]
                 + [_const_spec(c) for c in consts],
        out_specs=pl.BlockSpec((1, 1, 10), lambda b: (b, 0, 0)),
        compiler_params=pltpu.CompilerParams(
            dimension_semantics=("parallel",)),
    )(x, *consts)
    return out.reshape(B, 10)


# -------------------------------------------------------------- reference ---

def reference_forward(x, params):
    dn = ('NCHW', 'OIHW', 'NCHW')
    y = lax.conv_general_dilated(x, params['conv1_w'], (1, 1), 'VALID',
                                 dimension_numbers=dn)
    y = jnp.maximum(y + params['conv1_b'][None, :, None, None], 0.0)
    y = lax.reduce_window(y, -jnp.inf, lax.max, (1, 1, 2, 2), (1, 1, 2, 2), 'VALID')
    y = lax.conv_general_dilated(y, params['conv2_w'], (1, 1), 'VALID',
                                 dimension_numbers=dn)
    y = jnp.maximum(y + params['conv2_b'][None, :, None, None], 0.0)
    y = lax.reduce_window(y, -jnp.inf, lax.max, (1, 1, 2, 2), (1, 1, 2, 2), 'VALID')
    y = y.reshape(y.shape[0], -1)
    y = jnp.maximum(y @ params['fc1_w'].T + params['fc1_b'], 0.0)
    return y @ params['fc2_w'].T + params['fc2_b']


# ------------------------------------------------------------------- main ---

if __name__ == "__main__":
    key = jax.random.PRNGKey(0)
    ks = jax.random.split(key, 9)
    f32 = jnp.float32
    params = {
        'conv1_w': 0.1 * jax.random.normal(ks[0], (2, 1, 5, 5), f32),
        'conv1_b': 0.1 * jax.random.normal(ks[1], (2,), f32),
        'conv2_w': 0.1 * jax.random.normal(ks[2], (5, 2, 5, 5), f32),
        'conv2_b': 0.1 * jax.random.normal(ks[3], (5,), f32),
        'fc1_w':   0.1 * jax.random.normal(ks[4], (50, 80), f32),
        'fc1_b':   0.1 * jax.random.normal(ks[5], (50,), f32),
        'fc2_w':   0.1 * jax.random.normal(ks[6], (10, 50), f32),
        'fc2_b':   0.1 * jax.random.normal(ks[7], (10,), f32),
    }
    x = jax.random.normal(ks[8], (2, 1, 28, 28), f32)   # NCHW, MNIST-sized

    prep = prepare_params(params)                       # one-time host prep
    out = jax.block_until_ready(net_forward(x, prep))
    ref = jax.block_until_ready(reference_forward(x, params))

    assert out.shape == (2, 10) and out.dtype == jnp.float32
    err = float(jnp.max(jnp.abs(out - ref)))
    assert err < 1e-3, f"mismatch vs JAX reference: {err}"
    print("KERNEL_OK")
</pallas_src>

<mosaic_0001>
module attributes {stable_mosaic.version = 11 : i64} {
  func.func @net_kernel(%arg0: i32, %arg1: memref<1x28x28xf32, #tpu.memory_space<vmem>>, %arg2: memref<5x28x48xf32, #tpu.memory_space<vmem>>, %arg3: memref<1x48xf32, #tpu.memory_space<vmem>>, %arg4: memref<2x48x24xf32, #tpu.memory_space<vmem>>, %arg5: memref<2x12x24xf32, #tpu.memory_space<vmem>>, %arg6: memref<5x24x40xf32, #tpu.memory_space<vmem>>, %arg7: memref<1x40xf32, #tpu.memory_space<vmem>>, %arg8: memref<2x40x20xf32, #tpu.memory_space<vmem>>, %arg9: memref<2x4x8xf32, #tpu.memory_space<vmem>>, %arg10: memref<20x512xf32, #tpu.memory_space<vmem>>, %arg11: memref<1x50xf32, #tpu.memory_space<vmem>>, %arg12: memref<50x10xf32, #tpu.memory_space<vmem>>, %arg13: memref<1x10xf32, #tpu.memory_space<vmem>>, %arg14: memref<1x1x10xf32, #tpu.memory_space<vmem>>) attributes {dimension_semantics = [#tpu.dimension_semantics<parallel>], iteration_bounds = array<i64: 2>, scalar_prefetch = 0 : i64, scratch_operands = 0 : i64, tpu.core_type = #tpu.core_type<tc>, window_params = [{transform_indices = @transform_0, window_bounds = array<i64: 1, 28, 28>}, {pipeline_mode = #tpu.pipeline_mode<synchronous>, transform_indices = @transform_1, window_bounds = array<i64: 5, 28, 48>}, {pipeline_mode = #tpu.pipeline_mode<synchronous>, transform_indices = @transform_2, window_bounds = array<i64: 1, 48>}, {pipeline_mode = #tpu.pipeline_mode<synchronous>, transform_indices = @transform_3, window_bounds = array<i64: 2, 48, 24>}, {pipeline_mode = #tpu.pipeline_mode<synchronous>, transform_indices = @transform_4, window_bounds = array<i64: 2, 12, 24>}, {pipeline_mode = #tpu.pipeline_mode<synchronous>, transform_indices = @transform_5, window_bounds = array<i64: 5, 24, 40>}, {pipeline_mode = #tpu.pipeline_mode<synchronous>, transform_indices = @transform_6, window_bounds = array<i64: 1, 40>}, {pipeline_mode = #tpu.pipeline_mode<synchronous>, transform_indices = @transform_7, window_bounds = array<i64: 2, 40, 20>}, {pipeline_mode = #tpu.pipeline_mode<synchronous>, transform_indices = @transform_8, window_bounds = array<i64: 2, 4, 8>}, {pipeline_mode = #tpu.pipeline_mode<synchronous>, transform_indices = @transform_9, window_bounds = array<i64: 20, 512>}, {pipeline_mode = #tpu.pipeline_mode<synchronous>, transform_indices = @transform_10, window_bounds = array<i64: 1, 50>}, {pipeline_mode = #tpu.pipeline_mode<synchronous>, transform_indices = @transform_11, window_bounds = array<i64: 50, 10>}, {pipeline_mode = #tpu.pipeline_mode<synchronous>, transform_indices = @transform_12, window_bounds = array<i64: 1, 10>}, {transform_indices = @transform_13, window_bounds = array<i64: 1, 1, 10>}]} {
    %c0 = arith.constant 0 : index
    %c0_0 = arith.constant 0 : index
    %c0_1 = arith.constant 0 : index
    %0 = vector.load %arg1[%c0, %c0_0, %c0_1] : memref<1x28x28xf32, #tpu.memory_space<vmem>>, vector<1x28x28xf32>
    %1 = vector.shape_cast %0 : vector<1x28x28xf32> to vector<28x28xf32>
    %cst = arith.constant 0.000000e+00 : f32
    %2 = vector.broadcast %cst : f32 to vector<24x48xf32>
    %3 = vector.extract_strided_slice %1 {offsets = [0, 0], sizes = [24, 28], strides = [1, 1]} : vector<28x28xf32> to vector<24x28xf32>
    %c0_2 = arith.constant 0 : index
    %c0_3 = arith.constant 0 : index
    %c0_4 = arith.constant 0 : index
    %4 = vector.load %arg2[%c0_2, %c0_3, %c0_4] : memref<5x28x48xf32, #tpu.memory_space<vmem>>, vector<1x28x48xf32>
    %5 = vector.shape_cast %4 : vector<1x28x48xf32> to vector<28x48xf32>
    %cst_5 = arith.constant dense<0.000000e+00> : vector<24x48xf32>
    %6 = tpu.matmul %3, %5, %cst_5 {dimension_numbers = #tpu.dot_dimension_numbers<[1], [0], [0], [1], [0, 0, 1, 1], [], []>} : vector<24x28xf32>, vector<28x48xf32>, vector<24x48xf32> -> vector<24x48xf32>
    %7 = arith.addf %2, %6 : vector<24x48xf32>
    %8 = vector.extract_strided_slice %1 {offsets = [1, 0], sizes = [24, 28], strides = [1, 1]} : vector<28x28xf32> to vector<24x28xf32>
    %c1 = arith.constant 1 : index
    %c0_6 = arith.constant 0 : index
    %c0_7 = arith.constant 0 : index
    %9 = vector.load %arg2[%c1, %c0_6, %c0_7] : memref<5x28x48xf32, #tpu.memory_space<vmem>>, vector<1x28x48xf32>
    %10 = vector.shape_cast %9 : vector<1x28x48xf32> to vector<28x48xf32>
    %cst_8 = arith.constant dense<0.000000e+00> : vector<24x48xf32>
    %11 = tpu.matmul %8, %10, %cst_8 {dimension_numbers = #tpu.dot_dimension_numbers<[1], [0], [0], [1], [0, 0, 1, 1], [], []>} : vector<24x28xf32>, vector<28x48xf32>, vector<24x48xf32> -> vector<24x48xf32>
    %12 = arith.addf %7, %11 : vector<24x48xf32>
    %13 = vector.extract_strided_slice %1 {offsets = [2, 0], sizes = [24, 28], strides = [1, 1]} : vector<28x28xf32> to vector<24x28xf32>
    %c2 = arith.constant 2 : index
    %c0_9 = arith.constant 0 : index
    %c0_10 = arith.constant 0 : index
    %14 = vector.load %arg2[%c2, %c0_9, %c0_10] : memref<5x28x48xf32, #tpu.memory_space<vmem>>, vector<1x28x48xf32>
    %15 = vector.shape_cast %14 : vector<1x28x48xf32> to vector<28x48xf32>
    %cst_11 = arith.constant dense<0.000000e+00> : vector<24x48xf32>
    %16 = tpu.matmul %13, %15, %cst_11 {dimension_numbers = #tpu.dot_dimension_numbers<[1], [0], [0], [1], [0, 0, 1, 1], [], []>} : vector<24x28xf32>, vector<28x48xf32>, vector<24x48xf32> -> vector<24x48xf32>
    %17 = arith.addf %12, %16 : vector<24x48xf32>
    %18 = vector.extract_strided_slice %1 {offsets = [3, 0], sizes = [24, 28], strides = [1, 1]} : vector<28x28xf32> to vector<24x28xf32>
    %c3 = arith.constant 3 : index
    %c0_12 = arith.constant 0 : index
    %c0_13 = arith.constant 0 : index
    %19 = vector.load %arg2[%c3, %c0_12, %c0_13] : memref<5x28x48xf32, #tpu.memory_space<vmem>>, vector<1x28x48xf32>
    %20 = vector.shape_cast %19 : vector<1x28x48xf32> to vector<28x48xf32>
    %cst_14 = arith.constant dense<0.000000e+00> : vector<24x48xf32>
    %21 = tpu.matmul %18, %20, %cst_14 {dimension_numbers = #tpu.dot_dimension_numbers<[1], [0], [0], [1], [0, 0, 1, 1], [], []>} : vector<24x28xf32>, vector<28x48xf32>, vector<24x48xf32> -> vector<24x48xf32>
    %22 = arith.addf %17, %21 : vector<24x48xf32>
    %23 = vector.extract_strided_slice %1 {offsets = [4, 0], sizes = [24, 28], strides = [1, 1]} : vector<28x28xf32> to vector<24x28xf32>
    %c4 = arith.constant 4 : index
    %c0_15 = arith.constant 0 : index
    %c0_16 = arith.constant 0 : index
    %24 = vector.load %arg2[%c4, %c0_15, %c0_16] : memref<5x28x48xf32, #tpu.memory_space<vmem>>, vector<1x28x48xf32>
    %25 = vector.shape_cast %24 : vector<1x28x48xf32> to vector<28x48xf32>
    %cst_17 = arith.constant dense<0.000000e+00> : vector<24x48xf32>
    %26 = tpu.matmul %23, %25, %cst_17 {dimension_numbers = #tpu.dot_dimension_numbers<[1], [0], [0], [1], [0, 0, 1, 1], [], []>} : vector<24x28xf32>, vector<28x48xf32>, vector<24x48xf32> -> vector<24x48xf32>
    %27 = arith.addf %22, %26 : vector<24x48xf32>
    %c0_18 = arith.constant 0 : index
    %c0_19 = arith.constant 0 : index
    %28 = vector.load %arg3[%c0_18, %c0_19] : memref<1x48xf32, #tpu.memory_space<vmem>>, vector<1x48xf32>
    %29 = vector.broadcast %28 : vector<1x48xf32> to vector<24x48xf32>
    %30 = arith.addf %27, %29 : vector<24x48xf32>
    %cst_20 = arith.constant 0.000000e+00 : f32
    %31 = vector.broadcast %cst_20 : f32 to vector<24x48xf32>
    %32 = arith.maximumf %30, %31 : vector<24x48xf32>
    %c0_21 = arith.constant 0 : index
    %c0_22 = arith.constant 0 : index
    %c0_23 = arith.constant 0 : index
    %33 = vector.load %arg4[%c0_21, %c0_22, %c0_23] : memref<2x48x24xf32, #tpu.memory_space<vmem>>, vector<1x48x24xf32>
    %34 = vector.shape_cast %33 : vector<1x48x24xf32> to vector<48x24xf32>
    %cst_24 = arith.constant dense<0.000000e+00> : vector<24x24xf32>
    %35 = tpu.matmul %32, %34, %cst_24 {dimension_numbers = #tpu.dot_dimension_numbers<[1], [0], [0], [1], [0, 0, 1, 1], [], []>} : vector<24x48xf32>, vector<48x24xf32>, vector<24x24xf32> -> vector<24x24xf32>
    %c1_25 = arith.constant 1 : index
    %c0_26 = arith.constant 0 : index
    %c0_27 = arith.constant 0 : index
    %36 = vector.load %arg4[%c1_25, %c0_26, %c0_27] : memref<2x48x24xf32, #tpu.memory_space<vmem>>, vector<1x48x24xf32>
    %37 = vector.shape_cast %36 : vector<1x48x24xf32> to vector<48x24xf32>
    %cst_28 = arith.constant dense<0.000000e+00> : vector<24x24xf32>
    %38 = tpu.matmul %32, %37, %cst_28 {dimension_numbers = #tpu.dot_dimension_numbers<[1], [0], [0], [1], [0, 0, 1, 1], [], []>} : vector<24x48xf32>, vector<48x24xf32>, vector<24x24xf32> -> vector<24x24xf32>
    %39 = arith.maximumf %35, %38 : vector<24x24xf32>
    %c0_29 = arith.constant 0 : index
    %c0_30 = arith.constant 0 : index
    %c0_31 = arith.constant 0 : index
    %40 = vector.load %arg5[%c0_29, %c0_30, %c0_31] : memref<2x12x24xf32, #tpu.memory_space<vmem>>, vector<1x12x24xf32>
    %41 = vector.shape_cast %40 : vector<1x12x24xf32> to vector<12x24xf32>
    %cst_32 = arith.constant dense<0.000000e+00> : vector<12x24xf32>
    %42 = tpu.matmul %41, %39, %cst_32 {dimension_numbers = #tpu.dot_dimension_numbers<[1], [0], [0], [1], [0, 0, 1, 1], [], []>} : vector<12x24xf32>, vector<24x24xf32>, vector<12x24xf32> -> vector<12x24xf32>
    %c1_33 = arith.constant 1 : index
    %c0_34 = arith.constant 0 : index
    %c0_35 = arith.constant 0 : index
    %43 = vector.load %arg5[%c1_33, %c0_34, %c0_35] : memref<2x12x24xf32, #tpu.memory_space<vmem>>, vector<1x12x24xf32>
    %44 = vector.shape_cast %43 : vector<1x12x24xf32> to vector<12x24xf32>
    %cst_36 = arith.constant dense<0.000000e+00> : vector<12x24xf32>
    %45 = tpu.matmul %44, %39, %cst_36 {dimension_numbers = #tpu.dot_dimension_numbers<[1], [0], [0], [1], [0, 0, 1, 1], [], []>} : vector<12x24xf32>, vector<24x24xf32>, vector<12x24xf32> -> vector<12x24xf32>
    %46 = arith.maximumf %42, %45 : vector<12x24xf32>
    %cst_37 = arith.constant 0.000000e+00 : f32
    %47 = vector.broadcast %cst_37 : f32 to vector<8x40xf32>
    %48 = vector.extract_strided_slice %46 {offsets = [0, 0], sizes = [8, 24], strides = [1, 1]} : vector<12x24xf32> to vector<8x24xf32>
    %c0_38 = arith.constant 0 : index
    %c0_39 = arith.constant 0 : index
    %c0_40 = arith.constant 0 : index
    %49 = vector.load %arg6[%c0_38, %c0_39, %c0_40] : memref<5x24x40xf32, #tpu.memory_space<vmem>>, vector<1x24x40xf32>
    %50 = vector.shape_cast %49 : vector<1x24x40xf32> to vector<24x40xf32>
    %cst_41 = arith.constant dense<0.000000e+00> : vector<8x40xf32>
    %51 = tpu.matmul %48, %50, %cst_41 {dimension_numbers = #tpu.dot_dimension_numbers<[1], [0], [0], [1], [0, 0, 1, 1], [], []>} : vector<8x24xf32>, vector<24x40xf32>, vector<8x40xf32> -> vector<8x40xf32>
    %52 = arith.addf %47, %51 : vector<8x40xf32>
    %53 = vector.extract_strided_slice %46 {offsets = [1, 0], sizes = [8, 24], strides = [1, 1]} : vector<12x24xf32> to vector<8x24xf32>
    %c1_42 = arith.constant 1 : index
    %c0_43 = arith.constant 0 : index
    %c0_44 = arith.constant 0 : index
    %54 = vector.load %arg6[%c1_42, %c0_43, %c0_44] : memref<5x24x40xf32, #tpu.memory_space<vmem>>, vector<1x24x40xf32>
    %55 = vector.shape_cast %54 : vector<1x24x40xf32> to vector<24x40xf32>
    %cst_45 = arith.constant dense<0.000000e+00> : vector<8x40xf32>
    %56 = tpu.matmul %53, %55, %cst_45 {dimension_numbers = #tpu.dot_dimension_numbers<[1], [0], [0], [1], [0, 0, 1, 1], [], []>} : vector<8x24xf32>, vector<24x40xf32>, vector<8x40xf32> -> vector<8x40xf32>
    %57 = arith.addf %52, %56 : vector<8x40xf32>
    %58 = vector.extract_strided_slice %46 {offsets = [2, 0], sizes = [8, 24], strides = [1, 1]} : vector<12x24xf32> to vector<8x24xf32>
    %c2_46 = arith.constant 2 : index
    %c0_47 = arith.constant 0 : index
    %c0_48 = arith.constant 0 : index
    %59 = vector.load %arg6[%c2_46, %c0_47, %c0_48] : memref<5x24x40xf32, #tpu.memory_space<vmem>>, vector<1x24x40xf32>
    %60 = vector.shape_cast %59 : vector<1x24x40xf32> to vector<24x40xf32>
    %cst_49 = arith.constant dense<0.000000e+00> : vector<8x40xf32>
    %61 = tpu.matmul %58, %60, %cst_49 {dimension_numbers = #tpu.dot_dimension_numbers<[1], [0], [0], [1], [0, 0, 1, 1], [], []>} : vector<8x24xf32>, vector<24x40xf32>, vector<8x40xf32> -> vector<8x40xf32>
    %62 = arith.addf %57, %61 : vector<8x40xf32>
    %63 = vector.extract_strided_slice %46 {offsets = [3, 0], sizes = [8, 24], strides = [1, 1]} : vector<12x24xf32> to vector<8x24xf32>
    %c3_50 = arith.constant 3 : index
    %c0_51 = arith.constant 0 : index
    %c0_52 = arith.constant 0 : index
    %64 = vector.load %arg6[%c3_50, %c0_51, %c0_52] : memref<5x24x40xf32, #tpu.memory_space<vmem>>, vector<1x24x40xf32>
    %65 = vector.shape_cast %64 : vector<1x24x40xf32> to vector<24x40xf32>
    %cst_53 = arith.constant dense<0.000000e+00> : vector<8x40xf32>
    %66 = tpu.matmul %63, %65, %cst_53 {dimension_numbers = #tpu.dot_dimension_numbers<[1], [0], [0], [1], [0, 0, 1, 1], [], []>} : vector<8x24xf32>, vector<24x40xf32>, vector<8x40xf32> -> vector<8x40xf32>
    %67 = arith.addf %62, %66 : vector<8x40xf32>
    %68 = vector.extract_strided_slice %46 {offsets = [4, 0], sizes = [8, 24], strides = [1, 1]} : vector<12x24xf32> to vector<8x24xf32>
    %c4_54 = arith.constant 4 : index
    %c0_55 = arith.constant 0 : index
    %c0_56 = arith.constant 0 : index
    %69 = vector.load %arg6[%c4_54, %c0_55, %c0_56] : memref<5x24x40xf32, #tpu.memory_space<vmem>>, vector<1x24x40xf32>
    %70 = vector.shape_cast %69 : vector<1x24x40xf32> to vector<24x40xf32>
    %cst_57 = arith.constant dense<0.000000e+00> : vector<8x40xf32>
    %71 = tpu.matmul %68, %70, %cst_57 {dimension_numbers = #tpu.dot_dimension_numbers<[1], [0], [0], [1], [0, 0, 1, 1], [], []>} : vector<8x24xf32>, vector<24x40xf32>, vector<8x40xf32> -> vector<8x40xf32>
    %72 = arith.addf %67, %71 : vector<8x40xf32>
    %c0_58 = arith.constant 0 : index
    %c0_59 = arith.constant 0 : index
    %73 = vector.load %arg7[%c0_58, %c0_59] : memref<1x40xf32, #tpu.memory_space<vmem>>, vector<1x40xf32>
    %74 = vector.broadcast %73 : vector<1x40xf32> to vector<8x40xf32>
    %75 = arith.addf %72, %74 : vector<8x40xf32>
    %cst_60 = arith.constant 0.000000e+00 : f32
    %76 = vector.broadcast %cst_60 : f32 to vector<8x40xf32>
    %77 = arith.maximumf %75, %76 : vector<8x40xf32>
    %c0_61 = arith.constant 0 : index
    %c0_62 = arith.constant 0 : index
    %c0_63 = arith.constant 0 : index
    %78 = vector.load %arg8[%c0_61, %c0_62, %c0_63] : memref<2x40x20xf32, #tpu.memory_space<vmem>>, vector<1x40x20xf32>
    %79 = vector.shape_cast %78 : vector<1x40x20xf32> to vector<40x20xf32>
    %cst_64 = arith.constant dense<0.000000e+00> : vector<8x20xf32>
    %80 = tpu.matmul %77, %79, %cst_64 {dimension_numbers = #tpu.dot_dimension_numbers<[1], [0], [0], [1], [0, 0, 1, 1], [], []>} : vector<8x40xf32>, vector<40x20xf32>, vector<8x20xf32> -> vector<8x20xf32>
    %c1_65 = arith.constant 1 : index
    %c0_66 = arith.constant 0 : index
    %c0_67 = arith.constant 0 : index
    %81 = vector.load %arg8[%c1_65, %c0_66, %c0_67] : memref<2x40x20xf32, #tpu.memory_space<vmem>>, vector<1x40x20xf32>
    %82 = vector.shape_cast %81 : vector<1x40x20xf32> to vector<40x20xf32>
    %cst_68 = arith.constant dense<0.000000e+00> : vector<8x20xf32>
    %83 = tpu.matmul %77, %82, %cst_68 {dimension_numbers = #tpu.dot_dimension_numbers<[1], [0], [0], [1], [0, 0, 1, 1], [], []>} : vector<8x40xf32>, vector<40x20xf32>, vector<8x20xf32> -> vector<8x20xf32>
    %84 = arith.maximumf %80, %83 : vector<8x20xf32>
    %c0_69 = arith.constant 0 : index
    %c0_70 = arith.constant 0 : index
    %c0_71 = arith.constant 0 : index
    %85 = vector.load %arg9[%c0_69, %c0_70, %c0_71] : memref<2x4x8xf32, #tpu.memory_space<vmem>>, vector<1x4x8xf32>
    %86 = vector.shape_cast %85 : vector<1x4x8xf32> to vector<4x8xf32>
    %cst_72 = arith.constant dense<0.000000e+00> : vector<4x20xf32>
    %87 = tpu.matmul %86, %84, %cst_72 {dimension_numbers = #tpu.dot_dimension_numbers<[1], [0], [0], [1], [0, 0, 1, 1], [], []>} : vector<4x8xf32>, vector<8x20xf32>, vector<4x20xf32> -> vector<4x20xf32>
    %c1_73 = arith.constant 1 : index
    %c0_74 = arith.constant 0 : index
    %c0_75 = arith.constant 0 : index
    %88 = vector.load %arg9[%c1_73, %c0_74, %c0_75] : memref<2x4x8xf32, #tpu.memory_space<vmem>>, vector<1x4x8xf32>
    %89 = vector.shape_cast %88 : vector<1x4x8xf32> to vector<4x8xf32>
    %cst_76 = arith.constant dense<0.000000e+00> : vector<4x20xf32>
    %90 = tpu.matmul %89, %84, %cst_76 {dimension_numbers = #tpu.dot_dimension_numbers<[1], [0], [0], [1], [0, 0, 1, 1], [], []>} : vector<4x8xf32>, vector<8x20xf32>, vector<4x20xf32> -> vector<4x20xf32>
    %91 = arith.maximumf %87, %90 : vector<4x20xf32>
    %c0_77 = arith.constant 0 : index
    %c0_78 = arith.constant 0 : index
    %92 = vector.load %arg10[%c0_77, %c0_78] : memref<20x512xf32, #tpu.memory_space<vmem>>, vector<20x512xf32>
    %cst_79 = arith.constant dense<0.000000e+00> : vector<4x512xf32>
    %93 = tpu.matmul %91, %92, %cst_79 {dimension_numbers = #tpu.dot_dimension_numbers<[1], [0], [0], [1], [0, 0, 1, 1], [], []>} : vector<4x20xf32>, vector<20x512xf32>, vector<4x512xf32> -> vector<4x512xf32>
    %94 = vector.extract_strided_slice %93 {offsets = [0, 0], sizes = [1, 50], strides = [1, 1]} : vector<4x512xf32> to vector<1x50xf32>
    %95 = vector.extract_strided_slice %93 {offsets = [1, 128], sizes = [1, 50], strides = [1, 1]} : vector<4x512xf32> to vector<1x50xf32>
    %96 = arith.addf %94, %95 : vector<1x50xf32>
    %97 = vector.extract_strided_slice %93 {offsets = [2, 256], sizes = [1, 50], strides = [1, 1]} : vector<4x512xf32> to vector<1x50xf32>
    %98 = arith.addf %96, %97 : vector<1x50xf32>
    %99 = vector.extract_strided_slice %93 {offsets = [3, 384], sizes = [1, 50], strides = [1, 1]} : vector<4x512xf32> to vector<1x50xf32>
    %100 = arith.addf %98, %99 : vector<1x50xf32>
    %c0_80 = arith.constant 0 : index
    %c0_81 = arith.constant 0 : index
    %101 = vector.load %arg11[%c0_80, %c0_81] : memref<1x50xf32, #tpu.memory_space<vmem>>, vector<1x50xf32>
    %102 = arith.addf %100, %101 : vector<1x50xf32>
    %cst_82 = arith.constant 0.000000e+00 : f32
    %103 = vector.broadcast %cst_82 : f32 to vector<1x50xf32>
    %104 = arith.maximumf %102, %103 : vector<1x50xf32>
    %c0_83 = arith.constant 0 : index
    %c0_84 = arith.constant 0 : index
    %105 = vector.load %arg12[%c0_83, %c0_84] : memref<50x10xf32, #tpu.memory_space<vmem>>, vector<50x10xf32>
    %cst_85 = arith.constant dense<0.000000e+00> : vector<1x10xf32>
    %106 = tpu.matmul %104, %105, %cst_85 {dimension_numbers = #tpu.dot_dimension_numbers<[1], [0], [0], [1], [0, 0, 1, 1], [], []>} : vector<1x50xf32>, vector<50x10xf32>, vector<1x10xf32> -> vector<1x10xf32>
    %c0_86 = arith.constant 0 : index
    %c0_87 = arith.constant 0 : index
    %107 = vector.load %arg13[%c0_86, %c0_87] : memref<1x10xf32, #tpu.memory_space<vmem>>, vector<1x10xf32>
    %108 = arith.addf %106, %107 : vector<1x10xf32>
    %c0_88 = arith.constant 0 : index
    %c0_89 = arith.constant 0 : index
    %c0_90 = arith.constant 0 : index
    %109 = vector.load %arg14[%c0_88, %c0_89, %c0_90] : memref<1x1x10xf32, #tpu.memory_space<vmem>>, vector<1x1x10xf32>
    %110 = vector.shape_cast %109 : vector<1x1x10xf32> to vector<1x10xf32>
    %111 = vector.shape_cast %108 : vector<1x10xf32> to vector<1x1x10xf32>
    tpu.vector_store %arg14[%c0_88, %c0_89, %c0_90], %111 {strides = array<i32>} : memref<1x1x10xf32, #tpu.memory_space<vmem>>, vector<1x1x10xf32>,
    return
  }
  func.func @transform_0(%arg0: i32) -> (i32, i32, i32) {
    %c0_i32 = arith.constant 0 : i32
    %c0_i32_0 = arith.constant 0 : i32
    %c0_i32_1 = arith.constant 0 : i32
    return %arg0, %c0_i32, %c0_i32_0 : i32, i32, i32
  }
  func.func @transform_1(%arg0: i32) -> (i32, i32, i32) {
    %c0_i32 = arith.constant 0 : i32
    %c0_i32_0 = arith.constant 0 : i32
    %c0_i32_1 = arith.constant 0 : i32
    %c0_i32_2 = arith.constant 0 : i32
    return %c0_i32, %c0_i32_0, %c0_i32_1 : i32, i32, i32
  }
  func.func @transform_2(%arg0: i32) -> (i32, i32) {
    %c0_i32 = arith.constant 0 : i32
    %c0_i32_0 = arith.constant 0 : i32
    %c0_i32_1 = arith.constant 0 : i32
    return %c0_i32, %c0_i32_0 : i32, i32
  }
  func.func @transform_3(%arg0: i32) -> (i32, i32, i32) {
    %c0_i32 = arith.constant 0 : i32
    %c0_i32_0 = arith.constant 0 : i32
    %c0_i32_1 = arith.constant 0 : i32
    %c0_i32_2 = arith.constant 0 : i32
    return %c0_i32, %c0_i32_0, %c0_i32_1 : i32, i32, i32
  }
  func.func @transform_4(%arg0: i32) -> (i32, i32, i32) {
    %c0_i32 = arith.constant 0 : i32
    %c0_i32_0 = arith.constant 0 : i32
    %c0_i32_1 = arith.constant 0 : i32
    %c0_i32_2 = arith.constant 0 : i32
    return %c0_i32, %c0_i32_0, %c0_i32_1 : i32, i32, i32
  }
  func.func @transform_5(%arg0: i32) -> (i32, i32, i32) {
    %c0_i32 = arith.constant 0 : i32
    %c0_i32_0 = arith.constant 0 : i32
    %c0_i32_1 = arith.constant 0 : i32
    %c0_i32_2 = arith.constant 0 : i32
    return %c0_i32, %c0_i32_0, %c0_i32_1 : i32, i32, i32
  }
  func.func @transform_6(%arg0: i32) -> (i32, i32) {
    %c0_i32 = arith.constant 0 : i32
    %c0_i32_0 = arith.constant 0 : i32
    %c0_i32_1 = arith.constant 0 : i32
    return %c0_i32, %c0_i32_0 : i32, i32
  }
  func.func @transform_7(%arg0: i32) -> (i32, i32, i32) {
    %c0_i32 = arith.constant 0 : i32
    %c0_i32_0 = arith.constant 0 : i32
    %c0_i32_1 = arith.constant 0 : i32
    %c0_i32_2 = arith.constant 0 : i32
    return %c0_i32, %c0_i32_0, %c0_i32_1 : i32, i32, i32
  }
  func.func @transform_8(%arg0: i32) -> (i32, i32, i32) {
    %c0_i32 = arith.constant 0 : i32
    %c0_i32_0 = arith.constant 0 : i32
    %c0_i32_1 = arith.constant 0 : i32
    %c0_i32_2 = arith.constant 0 : i32
    return %c0_i32, %c0_i32_0, %c0_i32_1 : i32, i32, i32
  }
  func.func @transform_9(%arg0: i32) -> (i32, i32) {
    %c0_i32 = arith.constant 0 : i32
    %c0_i32_0 = arith.constant 0 : i32
    %c0_i32_1 = arith.constant 0 : i32
    return %c0_i32, %c0_i32_0 : i32, i32
  }
  func.func @transform_10(%arg0: i32) -> (i32, i32) {
    %c0_i32 = arith.constant 0 : i32
    %c0_i32_0 = arith.constant 0 : i32
    %c0_i32_1 = arith.constant 0 : i32
    return %c0_i32, %c0_i32_0 : i32, i32
  }
  func.func @transform_11(%arg0: i32) -> (i32, i32) {
    %c0_i32 = arith.constant 0 : i32
    %c0_i32_0 = arith.constant 0 : i32
    %c0_i32_1 = arith.constant 0 : i32
    return %c0_i32, %c0_i32_0 : i32, i32
  }
  func.func @transform_12(%arg0: i32) -> (i32, i32) {
    %c0_i32 = arith.constant 0 : i32
    %c0_i32_0 = arith.constant 0 : i32
    %c0_i32_1 = arith.constant 0 : i32
    return %c0_i32, %c0_i32_0 : i32, i32
  }
  func.func @transform_13(%arg0: i32) -> (i32, i32, i32) {
    %c0_i32 = arith.constant 0 : i32
    %c0_i32_0 = arith.constant 0 : i32
    %c0_i32_1 = arith.constant 0 : i32
    return %arg0, %c0_i32, %c0_i32_0 : i32, i32, i32
  }
}

</mosaic_0001>

<llo_original>
// kernel: net_forward.1
$region0: #{net_forward.1}
  #allocation0 [shape = 'u32[]', space=smem, size = 0x4, offset = 0x4, fixed_abs, tag = 'smem constant byte address 0x4 - core index']
  #allocation1 [shape = 'u32[144,128]{1,0:T(1,128)}', space=vmem, size = 0x12000, scoped, tag = 'internal scratch']
  %s0 = inlined_call_operand.vmem [shape: f32[2,28,28], index: 0, kind: input, shape index: {}]
  %s1 = inlined_call_operand.vmem [shape: f32[5,28,48], index: 1, kind: input, shape index: {}]
  %s2 = inlined_call_operand.vmem [shape: f32[1,48], index: 2, kind: input, shape index: {}]
  %s3 = inlined_call_operand.vmem [shape: f32[2,48,24], index: 3, kind: input, shape index: {}]
  %s4 = inlined_call_operand.vmem [shape: f32[2,12,24], index: 4, kind: input, shape index: {}]
  %s5 = inlined_call_operand.vmem [shape: f32[5,24,40], index: 5, kind: input, shape index: {}]
  %s6 = inlined_call_operand.vmem [shape: f32[1,40], index: 6, kind: input, shape index: {}]
  %s7 = inlined_call_operand.vmem [shape: f32[2,40,20], index: 7, kind: input, shape index: {}]
  %s8 = inlined_call_operand.vmem [shape: f32[2,4,8], index: 8, kind: input, shape index: {}]
  %s9 = inlined_call_operand.vmem [shape: f32[20,512], index: 9, kind: input, shape index: {}]
  %s10 = inlined_call_operand.vmem [shape: f32[1,50], index: 10, kind: input, shape index: {}]
  %s11 = inlined_call_operand.vmem [shape: f32[50,10], index: 11, kind: input, shape index: {}]
  %s12 = inlined_call_operand.vmem [shape: f32[1,10], index: 12, kind: input, shape index: {}]
  %s13 = inlined_call_operand.hbm [shape: f32[2,1,10], index: 13, kind: output, shape index: {}]
  %s14 = sld [smem:[#allocation0]]
  $region85: #{net_forward.1} parent=0
    _
  %s16 = ssub.s32 1, %s14
  %s17 = scalar_select 0, %s16, %s14
  $region1: #{net_forward.1} parent=0
    #allocation2 [shape = 'u8[1024]{0}', space=vmem, size = 0x400, scoped, tag = 'output window, operand 0']
    #allocation3 [shape = 's32[2]{0}', space=sflag, size = 0x8, scoped, tag = 'scoped memory for net_forward.1']
    %18 = vsyncpa [#allocation3], 0
    %s19 = scalar_lea.sflag [#allocation3], 1
    %20 = vsyncpa %s19, 0
    loop: start=0, step=1, limit=4
    $region2: #{net_forward.1} parent=1 // loop_pre_header
      _
    $region3: #{net_forward.1} parent=1 // loop_header
      %s22 = sphi 0, %s26
      %p23 = scmp.ge.s32.totalorder %s22, 4
      %s32 = sphi 0, %s34
      %s35 = sphi 0, %s32
      %s36 = sphi 0, %s35
      %s52 = sphi 0, %s36
      %s56 = sphi 0, %s56
      %s58 = sphi 0, %s56
      %s59 = sphi 0, %s58
      %s73 = sphi 0, %s59
      %s77 = sphi 0, %s77
      %s79 = sphi 0, %s77
      %s80 = sphi 0, %s79
      %s94 = sphi 0, %s80
      %s98 = sphi 0, %s98
      %s100 = sphi 0, %s98
      %s101 = sphi 0, %s100
      %s115 = sphi 0, %s101
      %s119 = sphi 0, %s119
      %s121 = sphi 0, %s119
      %s122 = sphi 0, %s121
      %s136 = sphi 0, %s122
      %s140 = sphi 0, %s140
      %s142 = sphi 0, %s140
      %s143 = sphi 0, %s142
      %s157 = sphi 0, %s143
      %s161 = sphi 0, %s161
      %s163 = sphi 0, %s161
      %s164 = sphi 0, %s163
      %s178 = sphi 0, %s164
      %s182 = sphi 0, %s182
      %s184 = sphi 0, %s182
      %s185 = sphi 0, %s184
      %s199 = sphi 0, %s185
      %s203 = sphi 0, %s203
      %s205 = sphi 0, %s203
      %s206 = sphi 0, %s205
      %s220 = sphi 0, %s206
      %s224 = sphi 0, %s224
      %s226 = sphi 0, %s224
      %s227 = sphi 0, %s226
      %s241 = sphi 0, %s227
      %s245 = sphi 0, %s245
      %s247 = sphi 0, %s245
      %s248 = sphi 0, %s247
      %s262 = sphi 0, %s248
      %s266 = sphi 0, %s266
      %s268 = sphi 0, %s266
      %s269 = sphi 0, %s268
      %s283 = sphi 0, %s269
      %s287 = sphi 0, %s287
      %s289 = sphi 0, %s287
      %s290 = sphi 0, %s289
      %s304 = sphi 0, %s290
      %s310 = sphi 0, %s312
      %s313 = sphi 0, %s310
      %s314 = sphi 0, %s313
      %s330 = sphi 0, %s314
    $region4: #{net_forward.1} parent=1 // loop_header_branch
      %25 = sbr.rel (%p23) target = $region8
    $region5: #{net_forward.1} parent=1 // loop_body
      %s27 = ssub.s32 %s22, 1
      %s28 = ssub.s32 %s22, 2
      %s29 = sadd.s32 %s22, 1
      %s30 = ssub.s32 %s22, %s29
      %p31 = scmp.eq.s32.totalorder %s30, 0
      %s33 = sadd.s32 %s32, 1
      %s34 = scalar_select %p31, %s32, %s33
      %p37 = pneg %p31
      %p38 = scmp.eq.s32.totalorder %s22, 1
      %p39 = por %p37, %p38
      %p40 = scmp.ne.s32.totalorder %s32, %s35
      %p41 = scmp.eq.s32.totalorder %s22, 0
      %p42 = por %p40, %p41
      %p43 = scmp.ne.s32.totalorder %s32, %s35
      %p44 = scmp.eq.s32.totalorder %s27, 1
      %p45 = por %p43, %p44
      %p46 = scmp.ne.s32.totalorder %s35, %s36
      %p47 = scmp.eq.s32.totalorder %s27, 0
      %p48 = por %p46, %p47
      %p49 = scmp.ne.s32.totalorder %s35, %s36
      %p50 = scmp.eq.s32.totalorder %s28, 1
      %p51 = por %p49, %p50
      %p53 = scmp.ne.s32.totalorder %s36, %s52
      %p54 = scmp.eq.s32.totalorder %s28, 0
      %p55 = por %p53, %p54
      %s57 = sadd.s32 %s56, 1
      %p60 = scmp.eq.s32.totalorder %s22, 1
      %p61 = scmp.ne.s32.totalorder %s56, %s58
      %p62 = scmp.eq.s32.totalorder %s22, 0
      %p63 = por %p61, %p62
      %p64 = scmp.ne.s32.totalorder %s56, %s58
      %p65 = scmp.eq.s32.totalorder %s27, 1
      %p66 = por %p64, %p65
      %p67 = scmp.ne.s32.totalorder %s58, %s59
      %p68 = scmp.eq.s32.totalorder %s27, 0
      %p69 = por %p67, %p68
      %p70 = scmp.ne.s32.totalorder %s58, %s59
      %p71 = scmp.eq.s32.totalorder %s28, 1
      %p72 = por %p70, %p71
      %p74 = scmp.ne.s32.totalorder %s59, %s73
      %p75 = scmp.eq.s32.totalorder %s28, 0
      %p76 = por %p74, %p75
      %s78 = sadd.s32 %s77, 1
      %p81 = scmp.eq.s32.totalorder %s22, 1
      %p82 = scmp.ne.s32.totalorder %s77, %s79
      %p83 = scmp.eq.s32.totalorder %s22, 0
      %p84 = por %p82, %p83
      %p85 = scmp.ne.s32.totalorder %s77, %s79
      %p86 = scmp.eq.s32.totalorder %s27, 1
      %p87 = por %p85, %p86
      %p88 = scmp.ne.s32.totalorder %s79, %s80
      %p89 = scmp.eq.s32.totalorder %s27, 0
      %p90 = por %p88, %p89
      %p91 = scmp.ne.s32.totalorder %s79, %s80
      %p92 = scmp.eq.s32.totalorder %s28, 1
      %p93 = por %p91, %p92
      %p95 = scmp.ne.s32.totalorder %s80, %s94
      %p96 = scmp.eq.s32.totalorder %s28, 0
      %p97 = por %p95, %p96
      %s99 = sadd.s32 %s98, 1
      %p102 = scmp.eq.s32.totalorder %s22, 1
      %p103 = scmp.ne.s32.totalorder %s98, %s100
      %p104 = scmp.eq.s32.totalorder %s22, 0
      %p105 = por %p103, %p104
      %p106 = scmp.ne.s32.totalorder %s98, %s100
      %p107 = scmp.eq.s32.totalorder %s27, 1
      %p108 = por %p106, %p107
      %p109 = scmp.ne.s32.totalorder %s100, %s101
      %p110 = scmp.eq.s32.totalorder %s27, 0
      %p111 = por %p109, %p110
      %p112 = scmp.ne.s32.totalorder %s100, %s101
      %p113 = scmp.eq.s32.totalorder %s28, 1
      %p114 = por %p112, %p113
      %p116 = scmp.ne.s32.totalorder %s101, %s115
      %p117 = scmp.eq.s32.totalorder %s28, 0
      %p118 = por %p116, %p117
      %s120 = sadd.s32 %s119, 1
      %p123 = scmp.eq.s32.totalorder %s22, 1
      %p124 = scmp.ne.s32.totalorder %s119, %s121
      %p125 = scmp.eq.s32.totalorder %s22, 0
      %p126 = por %p124, %p125
      %p127 = scmp.ne.s32.totalorder %s119, %s121
      %p128 = scmp.eq.s32.totalorder %s27, 1
      %p129 = por %p127, %p128
      %p130 = scmp.ne.s32.totalorder %s121, %s122
      %p131 = scmp.eq.s32.totalorder %s27, 0
      %p132 = por %p130, %p131
      %p133 = scmp.ne.s32.totalorder %s121, %s122
      %p134 = scmp.eq.s32.totalorder %s28, 1
      %p135 = por %p133, %p134
      %p137 = scmp.ne.s32.totalorder %s122, %s136
      %p138 = scmp.eq.s32.totalorder %s28, 0
      %p139 = por %p137, %p138
      %s141 = sadd.s32 %s140, 1
      %p144 = scmp.eq.s32.totalorder %s22, 1
      %p145 = scmp.ne.s32.totalorder %s140, %s142
      %p146 = scmp.eq.s32.totalorder %s22, 0
      %p147 = por %p145, %p146
      %p148 = scmp.ne.s32.totalorder %s140, %s142
      %p149 = scmp.eq.s32.totalorder %s27, 1
      %p150 = por %p148, %p149
      %p151 = scmp.ne.s32.totalorder %s142, %s143
      %p152 = scmp.eq.s32.totalorder %s27, 0
      %p153 = por %p151, %p152
      %p154 = scmp.ne.s32.totalorder %s142, %s143
      %p155 = scmp.eq.s32.totalorder %s28, 1
      %p156 = por %p154, %p155
      %p158 = scmp.ne.s32.totalorder %s143, %s157
      %p159 = scmp.eq.s32.totalorder %s28, 0
      %p160 = por %p158, %p159
      %s162 = sadd.s32 %s161, 1
      %p165 = scmp.eq.s32.totalorder %s22, 1
      %p166 = scmp.ne.s32.totalorder %s161, %s163
      %p167 = scmp.eq.s32.totalorder %s22, 0
      %p168 = por %p166, %p167
      %p169 = scmp.ne.s32.totalorder %s161, %s163
      %p170 = scmp.eq.s32.totalorder %s27, 1
      %p171 = por %p169, %p170
      %p172 = scmp.ne.s32.totalorder %s163, %s164
      %p173 = scmp.eq.s32.totalorder %s27, 0
      %p174 = por %p172, %p173
      %p175 = scmp.ne.s32.totalorder %s163, %s164
      %p176 = scmp.eq.s32.totalorder %s28, 1
      %p177 = por %p175, %p176
      %p179 = scmp.ne.s32.totalorder %s164, %s178
      %p180 = scmp.eq.s32.totalorder %s28, 0
      %p181 = por %p179, %p180
      %s183 = sadd.s32 %s182, 1
      %p186 = scmp.eq.s32.totalorder %s22, 1
      %p187 = scmp.ne.s32.totalorder %s182, %s184
      %p188 = scmp.eq.s32.totalorder %s22, 0
      %p189 = por %p187, %p188
      %p190 = scmp.ne.s32.totalorder %s182, %s184
      %p191 = scmp.eq.s32.totalorder %s27, 1
      %p192 = por %p190, %p191
      %p193 = scmp.ne.s32.totalorder %s184, %s185
      %p194 = scmp.eq.s32.totalorder %s27, 0
      %p195 = por %p193, %p194
      %p196 = scmp.ne.s32.totalorder %s184, %s185
      %p197 = scmp.eq.s32.totalorder %s28, 1
      %p198 = por %p196, %p197
      %p200 = scmp.ne.s32.totalorder %s185, %s199
      %p201 = scmp.eq.s32.totalorder %s28, 0
      %p202 = por %p200, %p201
      %s204 = sadd.s32 %s203, 1
      %p207 = scmp.eq.s32.totalorder %s22, 1
      %p208 = scmp.ne.s32.totalorder %s203, %s205
      %p209 = scmp.eq.s32.totalorder %s22, 0
      %p210 = por %p208, %p209
      %p211 = scmp.ne.s32.totalorder %s203, %s205
      %p212 = scmp.eq.s32.totalorder %s27, 1
      %p213 = por %p211, %p212
      %p214 = scmp.ne.s32.totalorder %s205, %s206
      %p215 = scmp.eq.s32.totalorder %s27, 0
      %p216 = por %p214, %p215
      %p217 = scmp.ne.s32.totalorder %s205, %s206
      %p218 = scmp.eq.s32.totalorder %s28, 1
      %p219 = por %p217, %p218
      %p221 = scmp.ne.s32.totalorder %s206, %s220
      %p222 = scmp.eq.s32.totalorder %s28, 0
      %p223 = por %p221, %p222
      %s225 = sadd.s32 %s224, 1
      %p228 = scmp.eq.s32.totalorder %s22, 1
      %p229 = scmp.ne.s32.totalorder %s224, %s226
      %p230 = scmp.eq.s32.totalorder %s22, 0
      %p231 = por %p229, %p230
      %p232 = scmp.ne.s32.totalorder %s224, %s226
      %p233 = scmp.eq.s32.totalorder %s27, 1
      %p234 = por %p232, %p233
      %p235 = scmp.ne.s32.totalorder %s226, %s227
      %p236 = scmp.eq.s32.totalorder %s27, 0
      %p237 = por %p235, %p236
      %p238 = scmp.ne.s32.totalorder %s226, %s227
      %p239 = scmp.eq.s32.totalorder %s28, 1
      %p240 = por %p238, %p239
      %p242 = scmp.ne.s32.totalorder %s227, %s241
      %p243 = scmp.eq.s32.totalorder %s28, 0
      %p244 = por %p242, %p243
      %s246 = sadd.s32 %s245, 1
      %p249 = scmp.eq.s32.totalorder %s22, 1
      %p250 = scmp.ne.s32.totalorder %s245, %s247
      %p251 = scmp.eq.s32.totalorder %s22, 0
      %p252 = por %p250, %p251
      %p253 = scmp.ne.s32.totalorder %s245, %s247
      %p254 = scmp.eq.s32.totalorder %s27, 1
      %p255 = por %p253, %p254
      %p256 = scmp.ne.s32.totalorder %s247, %s248
      %p257 = scmp.eq.s32.totalorder %s27, 0
      %p258 = por %p256, %p257
      %p259 = scmp.ne.s32.totalorder %s247, %s248
      %p260 = scmp.eq.s32.totalorder %s28, 1
      %p261 = por %p259, %p260
      %p263 = scmp.ne.s32.totalorder %s248, %s262
      %p264 = scmp.eq.s32.totalorder %s28, 0
      %p265 = por %p263, %p264
      %s267 = sadd.s32 %s266, 1
      %p270 = scmp.eq.s32.totalorder %s22, 1
      %p271 = scmp.ne.s32.totalorder %s266, %s268
      %p272 = scmp.eq.s32.totalorder %s22, 0
      %p273 = por %p271, %p272
      %p274 = scmp.ne.s32.totalorder %s266, %s268
      %p275 = scmp.eq.s32.totalorder %s27, 1
      %p276 = por %p274, %p275
      %p277 = scmp.ne.s32.totalorder %s268, %s269
      %p278 = scmp.eq.s32.totalorder %s27, 0
      %p279 = por %p277, %p278
      %p280 = scmp.ne.s32.totalorder %s268, %s269
      %p281 = scmp.eq.s32.totalorder %s28, 1
      %p282 = por %p280, %p281
      %p284 = scmp.ne.s32.totalorder %s269, %s283
      %p285 = scmp.eq.s32.totalorder %s28, 0
      %p286 = por %p284, %p285
      %s288 = sadd.s32 %s287, 1
      %p291 = scmp.eq.s32.totalorder %s22, 1
      %p292 = scmp.ne.s32.totalorder %s287, %s289
      %p293 = scmp.eq.s32.totalorder %s22, 0
      %p294 = por %p292, %p293
      %p295 = scmp.ne.s32.totalorder %s287, %s289
      %p296 = scmp.eq.s32.totalorder %s27, 1
      %p297 = por %p295, %p296
      %p298 = scmp.ne.s32.totalorder %s289, %s290
      %p299 = scmp.eq.s32.totalorder %s27, 0
      %p300 = por %p298, %p299
      %p301 = scmp.ne.s32.totalorder %s289, %s290
      %p302 = scmp.eq.s32.totalorder %s28, 1
      %p303 = por %p301, %p302
      %p305 = scmp.ne.s32.totalorder %s290, %s304
      %p306 = scmp.eq.s32.totalorder %s28, 0
      %p307 = por %p305, %p306
      %s308 = ssub.s32 %s22, %s29
      %p309 = scmp.eq.s32.totalorder %s308, 0
      %s311 = sadd.s32 %s310, 1
      %s312 = scalar_select %p309, %s310, %s311
      %p315 = pneg %p309
      %p316 = scmp.eq.s32.totalorder %s22, 1
      %p317 = por %p315, %p316
      %p318 = scmp.ne.s32.totalorder %s310, %s313
      %p319 = scmp.eq.s32.totalorder %s22, 0
      %p320 = por %p318, %p319
      %p321 = scmp.ne.s32.totalorder %s310, %s313
      %p322 = scmp.eq.s32.totalorder %s27, 1
      %p323 = por %p321, %p322
      %p324 = scmp.ne.s32.totalorder %s313, %s314
      %p325 = scmp.eq.s32.totalorder %s27, 0
      %p326 = por %p324, %p325
      %p327 = scmp.ne.s32.totalorder %s313, %s314
      %p328 = scmp.eq.s32.totalorder %s28, 1
      %p329 = por %p327, %p328
      %p331 = scmp.ne.s32.totalorder %s314, %s330
      %p332 = scmp.eq.s32.totalorder %s28, 0
      %p333 = por %p331, %p332
      %p334 = scmp.le.s32.totalorder 1, %s22
      %p335 = scmp.lt.s32.totalorder %s22, 3
      %p336 = pnand %p334, %p335
      %p337 = pneg %p336
      // Predicated region
      $region9: #{net_forward.1} parent=5 // pred_check
        _
      $region10: #{net_forward.1} parent=5 // pred_check_branch
        %339 = sbr.rel (%p336) target = $region12
      $region11: #{net_forward.1} parent=5 // pred_region
        %s340 = ssub.s32 %s22, 1
        // Predicated region
        $region13: #{net_forward.1} parent=11 // pred_check
          %p341 = pneg %p69
        $region14: #{net_forward.1} parent=11 // pred_check_branch
          %343 = sbr.rel (%p341) target = $region16
        $region15: #{net_forward.1} parent=11 // pred_region
          _
        $region16: #{net_forward.1} parent=11 // pred_fallthru
          _
        // Predicated region
        $region17: #{net_forward.1} parent=11 // pred_check
          %p344 = pneg %p90
        $region18: #{net_forward.1} parent=11 // pred_check_branch
          %346 = sbr.rel (%p344) target = $region20
        $region19: #{net_forward.1} parent=11 // pred_region
          _
        $region20: #{net_forward.1} parent=11 // pred_fallthru
          _
        // Predicated region
        $region21: #{net_forward.1} parent=11 // pred_check
          %p347 = pneg %p111
        $region22: #{net_forward.1} parent=11 // pred_check_branch
          %349 = sbr.rel (%p347) target = $region24
        $region23: #{net_forward.1} parent=11 // pred_region
          _
        $region24: #{net_forward.1} parent=11 // pred_fallthru
          _
        // Predicated region
        $region25: #{net_forward.1} parent=11 // pred_check
          %p350 = pneg %p132
        $region26: #{net_forward.1} parent=11 // pred_check_branch
          %352 = sbr.rel (%p350) target = $region28
        $region27: #{net_forward.1} parent=11 // pred_region
          _
        $region28: #{net_forward.1} parent=11 // pred_fallthru
          _
        // Predicated region
        $region29: #{net_forward.1} parent=11 // pred_check
          %p353 = pneg %p153
        $region30: #{net_forward.1} parent=11 // pred_check_branch
          %355 = sbr.rel (%p353) target = $region32
        $region31: #{net_forward.1} parent=11 // pred_region
          _
        $region32: #{net_forward.1} parent=11 // pred_fallthru
          _
        // Predicated region
        $region33: #{net_forward.1} parent=11 // pred_check
          %p356 = pneg %p174
        $region34: #{net_forward.1} parent=11 // pred_check_branch
          %358 = sbr.rel (%p356) target = $region36
        $region35: #{net_forward.1} parent=11 // pred_region
          _
        $region36: #{net_forward.1} parent=11 // pred_fallthru
          _
        // Predicated region
        $region37: #{net_forward.1} parent=11 // pred_check
          %p359 = pneg %p195
        $region38: #{net_forward.1} parent=11 // pred_check_branch
          %361 = sbr.rel (%p359) target = $region40
        $region39: #{net_forward.1} parent=11 // pred_region
          _
        $region40: #{net_forward.1} parent=11 // pred_fallthru
          _
        // Predicated region
        $region41: #{net_forward.1} parent=11 // pred_check
          %p362 = pneg %p216
        $region42: #{net_forward.1} parent=11 // pred_check_branch
          %364 = sbr.rel (%p362) target = $region44
        $region43: #{net_forward.1} parent=11 // pred_region
          _
        $region44: #{net_forward.1} parent=11 // pred_fallthru
          _
        // Predicated region
        $region45: #{net_forward.1} parent=11 // pred_check
          %p365 = pneg %p237
        $region46: #{net_forward.1} parent=11 // pred_check_branch
          %367 = sbr.rel (%p365) target = $region48
        $region47: #{net_forward.1} parent=11 // pred_region
          _
        $region48: #{net_forward.1} parent=11 // pred_fallthru
          _
        // Predicated region
        $region49: #{net_forward.1} parent=11 // pred_check
          %p368 = pneg %p258
        $region50: #{net_forward.1} parent=11 // pred_check_branch
          %370 = sbr.rel (%p368) target = $region52
        $region51: #{net_forward.1} parent=11 // pred_region
          _
        $region52: #{net_forward.1} parent=11 // pred_fallthru
          _
        // Predicated region
        $region53: #{net_forward.1} parent=11 // pred_check
          %p371 = pneg %p279
        $region54: #{net_forward.1} parent=11 // pred_check_branch
          %373 = sbr.rel (%p371) target = $region56
        $region55: #{net_forward.1} parent=11 // pred_region
          _
        $region56: #{net_forward.1} parent=11 // pred_fallthru
          _
        // Predicated region
        $region57: #{net_forward.1} parent=11 // pred_check
          %p374 = pneg %p300
        $region58: #{net_forward.1} parent=11 // pred_check_branch
          %376 = sbr.rel (%p374) target = $region60
        $region59: #{net_forward.1} parent=11 // pred_region
          _
        $region60: #{net_forward.1} parent=11 // pred_fallthru
          _
      $region12: #{net_forward.1} parent=5 // pred_fallthru
        _
      %p377 = scmp.lt.s32.totalorder %s22, 2
      // Predicated region
      $region61: #{net_forward.1} parent=5 // pred_check
        %p378 = pneg %p377
      $region62: #{net_forward.1} parent=5 // pred_check_branch
        %380 = sbr.rel (%p378) target = $region64
      $region63: #{net_forward.1} parent=5 // pred_region
        // Predicated region
        $region65: #{net_forward.1} parent=63 // pred_check
          %p381 = pneg %p42
        $region66: #{net_forward.1} parent=63 // pred_check_branch
          %383 = sbr.rel (%p381) target = $region68
        $region67: #{net_forward.1} parent=63 // pred_region
          %p384 = scmp.lt.s32.totalorder %s22, 1
          %s385 = scalar_select %p384, %s22, 1
          %s386 = smul.addr %s385, 4
          %s387 = smul.addr %s386, 8
          %s388 = scalar_lea.vmem %s0, %s387
        $region68: #{net_forward.1} parent=63 // pred_fallthru
          _
      $region64: #{net_forward.1} parent=5 // pred_fallthru
        _
      %p389 = scmp.le.s32.totalorder 1, %s22
      %p390 = scmp.lt.s32.totalorder %s22, 3
      %p391 = pnand %p389, %p390
      %p392 = pneg %p391
      // Predicated region
      $region69: #{net_forward.1} parent=5 // pred_check
        _
      $region70: #{net_forward.1} parent=5 // pred_check_branch
        %394 = sbr.rel (%p391) target = $region72
      $region71: #{net_forward.1} parent=5 // pred_region
        %s395 = ssub.s32 %s22, 1
        %p396 = scmp.lt.s32.totalorder %s27, 1
        %s397 = scalar_select %p396, %s27, 1
        %s398 = smul.addr %s397, 4
        %s399 = smul.addr %s398, 8
        %s400 = scalar_lea.vmem %s0, %s399
        %p401 = pneg %p48
        %p402 = pneg %p45
        %p403 = pneg %p69
        %p404 = pneg %p66
        %p405 = pneg %p90
        %p406 = pneg %p87
        %p407 = pneg %p111
        %p408 = pneg %p108
        %p409 = pneg %p132
        %p410 = pneg %p129
        %p411 = pneg %p153
        %p412 = pneg %p150
        %p413 = pneg %p174
        %p414 = pneg %p171
        %p415 = pneg %p195
        %p416 = pneg %p192
        %p417 = pneg %p216
        %p418 = pneg %p213
        %p419 = pneg %p237
        %p420 = pneg %p234
        %p421 = pneg %p258
        %p422 = pneg %p255
        %p423 = pneg %p279
        %p424 = pneg %p276
        %p425 = pneg %p300
        %p426 = pneg %p297
        %p427 = pneg %p326
        %p428 = pneg %p323
        %s429 = sand.u32 %s313, 1
        %s430 = scalar_lea.sflag [#allocation3], %s429
        %s431 = sand.u32 %s313, 1
        %s432 = scalar_lea.vmem [#allocation2], %s431
        %p433 = scmp.lt.s32.totalorder %s27, 1
        %s434 = scalar_select %p433, %s27, 1
        %s435 = smul.addr %s434, 4
        %s436 = smul.addr %s435, 8
        %s437 = scalar_lea.vmem %s0, %s436
        %v438 = vld [vmem:[%s437] sm:$0xff]
        %v439 = vld [vmem:[%s437 + $0x8] sm:$0xff]
        %v440 = vld [vmem:[%s437 + $0x10] sm:$0xff]
        %v441 = vld [vmem:[%s437 + $0x18] sm:$0xf]
        %v442 = vld [vmem:[%s1] sm:$0xff]
        %v443 = vld [vmem:[%s1 + $0x8] sm:$0xff]
        %v444 = vld [vmem:[%s1 + $0x10] sm:$0xff]
        %v445 = vld [vmem:[%s1 + $0x18] sm:$0xf]
        %s446 = scalar_lea.vmem %s1, 32
        %v447 = vld [vmem:[%s446] sm:$0xff]
        %v448 = vld [vmem:[%s446 + $0x8] sm:$0xff]
        %v449 = vld [vmem:[%s446 + $0x10] sm:$0xff]
        %v450 = vld [vmem:[%s446 + $0x18] sm:$0xf]
        %vm455 = vcmask 1046528
        %v456 = vrot.slane %v438, 1
        %v457 = vrot.slane %v439, 1
        %v458 = vsel %vm455, %v456, %v457
        %v459 = vrot.slane %v440, 1
        %v460 = vsel %vm455, %v457, %v459
        %v461 = vrot.slane %v441, 1
        %v462 = vsel %vm455, %v459, %v461
        %vm463 = vcmask 228352
        %v464 = vsel %vm463, %v458, 0
        %v466 = vsel %vm463, %v460, 0
        %v468 = vsel %vm463, %v462, 0
        %vm470 = vcmask 1043456
        %v472 = vsel %vm470, %v450, 0
        %474 = vmatprep.subr.mxu0 0.0
        %475 = vmatpush1.msra.mxu0 0.0
        %476 = vmatprep.subr.mxu0 0.0
        %477 = vmatpush1.msra.mxu0 0.0
        %478 = vmatprep.subr.mxu0 0.0
        %479 = vmatpush1.msra.mxu0 0.0
        %480 = vmatprep.subr.mxu0 0.0
        %481 = vmatpush1.msra.mxu0 0.0
        %482 = vmatprep.subr.mxu0 0.0
        %483 = vmatpush1.msra.mxu0 0.0
        %484 = vmatprep.subr.mxu0 0.0
        %485 = vmatpush1.msra.mxu0 0.0
        %486 = vmatprep.subr.mxu0 0.0
        %487 = vmatpush1.msra.mxu0 0.0
        %488 = vmatprep.subr.mxu0 0.0
        %489 = vmatpush1.msra.mxu0 0.0
        %490 = vmatprep.subr.mxu0 0.0
        %491 = vmatpush1.msra.mxu0 0.0
        %492 = vmatprep.subr.mxu0 0.0
        %493 = vmatpush1.msra.mxu0 0.0
        %494 = vmatprep.subr.mxu0 0.0
        %495 = vmatpush1.msra.mxu0 0.0
        %496 = vmatprep.subr.mxu0 0.0
        %497 = vmatpush1.msra.mxu0 0.0
        %498 = vmatprep.subr.mxu0 0.0
        %499 = vmatpush1.msra.mxu0 %v472
        %500 = vmatprep.subr.mxu0 0.0
        %501 = vmatpush1.msra.mxu0 %v449
        %502 = vmatprep.subr.mxu0 0.0
        %503 = vmatpush1.msra.mxu0 %v448
        %504 = vmatprep.subr.mxu0 0.0
        %505 = vmatpush1.msra.mxu0 %v447
        %506 = vmatprep.subr.mxu0 0.0
        %507 = vmatpush2.msra.mxu0 0.0
        %508 = vmatprep.subr.mxu0 0.0
        %509 = vmatpush2.msra.mxu0 0.0
        %510 = vmatprep.subr.mxu0 0.0
        %511 = vmatpush2.msra.mxu0 0.0
        %512 = vmatprep.subr.mxu0 0.0
        %513 = vmatpush2.msra.mxu0 0.0
        %514 = vmatprep.subr.mxu0 0.0
        %515 = vmatpush2.msra.mxu0 0.0
        %516 = vmatprep.subr.mxu0 0.0
        %517 = vmatpush2.msra.mxu0 0.0
        %518 = vmatprep.subr.mxu0 0.0
        %519 = vmatpush2.msra.mxu0 0.0
        %520 = vmatprep.subr.mxu0 0.0
        %521 = vmatpush2.msra.mxu0 0.0
        %522 = vmatprep.subr.mxu0 0.0
        %523 = vmatpush2.msra.mxu0 0.0
        %524 = vmatprep.subr.mxu0 0.0
        %525 = vmatpush2.msra.mxu0 0.0
        %526 = vmatprep.subr.mxu0 0.0
        %527 = vmatpush2.msra.mxu0 0.0
        %528 = vmatprep.subr.mxu0 0.0
        %529 = vmatpush2.msra.mxu0 0.0
        %530 = vmatprep.subr.mxu0 0.0
        %531 = vmatpush2.msra.mxu0 0.0
        %532 = vmatprep.subr.mxu0 0.0
        %533 = vmatpush2.msra.mxu0 0.0
        %534 = vmatprep.subr.mxu0 0.0
        %535 = vmatpush2.msra.mxu0 0.0
        %536 = vmatprep.subr.mxu0 0.0
        %537 = vmatpush2.msra.mxu0 0.0
        %538 = vmatprep.mubr.f32.mxu0 0.0
        %539 = vmatmul.mubr.f32.gmra.mxu0 %v464
        %v540 = vpop.f32.mrf.mxu0
        %v541 = vadd.f32 0.0, %v540
        %v542 = vpop.f32.mrf.mxu0
        %543 = vmatprep.mubr.f32.mxu0 0.0
        %544 = vmatmul.mubr.f32.gmra.mxu0 %v466
        %v545 = vpop.f32.mrf.mxu0
        %v546 = vadd.f32 0.0, %v545
        %v547 = vpop.f32.mrf.mxu0
        %548 = vmatprep.mubr.f32.mxu0 0.0
        %549 = vmatmul.mubr.f32.gmra.mxu0 %v468
        %v550 = vpop.f32.mrf.mxu0
        %v551 = vadd.f32 0.0, %v550
        %v552 = vpop.f32.mrf.mxu0
        %553 = vdwg.mxu0
        %v554 = vsel %vm463, %v438, 0
        %v556 = vsel %vm463, %v439, 0
        %v558 = vsel %vm463, %v440, 0
        %v561 = vsel %vm470, %v445, 0
        %563 = vmatprep.subr.mxu0 0.0
        %564 = vmatpush1.msra.mxu0 0.0
        %565 = vmatprep.subr.mxu0 0.0
        %566 = vmatpush1.msra.mxu0 0.0
        %567 = vmatprep.subr.mxu0 0.0
        %568 = vmatpush1.msra.mxu0 0.0
        %569 = vmatprep.subr.mxu0 0.0
        %570 = vmatpush1.msra.mxu0 0.0
        %571 = vmatprep.subr.mxu0 0.0
        %572 = vmatpush1.msra.mxu0 0.0
        %573 = vmatprep.subr.mxu0 0.0
        %574 = vmatpush1.msra.mxu0 0.0
        %575 = vmatprep.subr.mxu0 0.0
        %576 = vmatpush1.msra.mxu0 0.0
        %577 = vmatprep.subr.mxu0 0.0
        %578 = vmatpush1.msra.mxu0 0.0
        %579 = vmatprep.subr.mxu0 0.0
        %580 = vmatpush1.msra.mxu0 0.0
        %581 = vmatprep.subr.mxu0 0.0
        %582 = vmatpush1.msra.mxu0 0.0
        %583 = vmatprep.subr.mxu0 0.0
        %584 = vmatpush1.msra.mxu0 0.0
        %585 = vmatprep.subr.mxu0 0.0
        %586 = vmatpush1.msra.mxu0 0.0
        %587 = vmatprep.subr.mxu0 0.0
        %588 = vmatpush1.msra.mxu0 %v561
        %589 = vmatprep.subr.mxu0 0.0
        %590 = vmatpush1.msra.mxu0 %v444
        %591 = vmatprep.subr.mxu0 0.0
        %592 = vmatpush1.msra.mxu0 %v443
        %593 = vmatprep.subr.mxu0 0.0
        %594 = vmatpush1.msra.mxu0 %v442
        %595 = vmatprep.subr.mxu0 0.0
        %596 = vmatpush2.msra.mxu0 0.0
        %597 = vmatprep.subr.mxu0 0.0
        %598 = vmatpush2.msra.mxu0 0.0
        %599 = vmatprep.subr.mxu0 0.0
        %600 = vmatpush2.msra.mxu0 0.0
        %601 = vmatprep.subr.mxu0 0.0
        %602 = vmatpush2.msra.mxu0 0.0
        %603 = vmatprep.subr.mxu0 0.0
        %604 = vmatpush2.msra.mxu0 0.0
        %605 = vmatprep.subr.mxu0 0.0
        %606 = vmatpush2.msra.mxu0 0.0
        %607 = vmatprep.subr.mxu0 0.0
        %608 = vmatpush2.msra.mxu0 0.0
        %609 = vmatprep.subr.mxu0 0.0
        %610 = vmatpush2.msra.mxu0 0.0
        %611 = vmatprep.subr.mxu0 0.0
        %612 = vmatpush2.msra.mxu0 0.0
        %613 = vmatprep.subr.mxu0 0.0
        %614 = vmatpush2.msra.mxu0 0.0
        %615 = vmatprep.subr.mxu0 0.0
        %616 = vmatpush2.msra.mxu0 0.0
        %617 = vmatprep.subr.mxu0 0.0
        %618 = vmatpush2.msra.mxu0 0.0
        %619 = vmatprep.subr.mxu0 0.0
        %620 = vmatpush2.msra.mxu0 0.0
        %621 = vmatprep.subr.mxu0 0.0
        %622 = vmatpush2.msra.mxu0 0.0
        %623 = vmatprep.subr.mxu0 0.0
        %624 = vmatpush2.msra.mxu0 0.0
        %625 = vmatprep.subr.mxu0 0.0
        %626 = vmatpush2.msra.mxu0 0.0
        %627 = vmatprep.mubr.f32.mxu0 0.0
        %628 = vmatmul.mubr.f32.gmra.mxu0 %v554
        %v629 = vpop.f32.mrf.mxu0
        %v630 = vadd.f32 %v541, %v629
        %v631 = vpop.f32.mrf.mxu0
        %632 = vmatprep.mubr.f32.mxu0 0.0
        %633 = vmatmul.mubr.f32.gmra.mxu0 %v556
        %v634 = vpop.f32.mrf.mxu0
        %v635 = vadd.f32 %v546, %v634
        %v636 = vpop.f32.mrf.mxu0
        %637 = vmatprep.mubr.f32.mxu0 0.0
        %638 = vmatmul.mubr.f32.gmra.mxu0 %v558
        %v639 = vpop.f32.mrf.mxu0
        %v640 = vadd.f32 %v551, %v639
        %v641 = vpop.f32.mrf.mxu0
        %642 = vdwg.mxu0
        %s643 = scalar_lea.vmem %s1, 64
        %v644 = vld [vmem:[%s643] sm:$0xff]
        %v645 = vld [vmem:[%s643 + $0x8] sm:$0xff]
        %v646 = vld [vmem:[%s643 + $0x10] sm:$0xff]
        %v647 = vld [vmem:[%s643 + $0x18] sm:$0xf]
        %vm648 = vcmask 1045504
        %v649 = vrot.slane %v438, 2
        %v650 = vrot.slane %v439, 2
        %v651 = vsel %vm648, %v649, %v650
        %v652 = vrot.slane %v440, 2
        %v653 = vsel %vm648, %v650, %v652
        %v654 = vrot.slane %v441, 2
        %v655 = vsel %vm648, %v652, %v654
        %v656 = vsel %vm463, %v651, 0
        %v658 = vsel %vm463, %v653, 0
        %v660 = vsel %vm463, %v655, 0
        %v663 = vsel %vm470, %v647, 0
        %665 = vmatprep.subr.mxu0 0.0
        %666 = vmatpush1.msra.mxu0 0.0
        %667 = vmatprep.subr.mxu0 0.0
        %668 = vmatpush1.msra.mxu0 0.0
        %669 = vmatprep.subr.mxu0 0.0
        %670 = vmatpush1.msra.mxu0 0.0
        %671 = vmatprep.subr.mxu0 0.0
        %672 = vmatpush1.msra.mxu0 0.0
        %673 = vmatprep.subr.mxu0 0.0
        %674 = vmatpush1.msra.mxu0 0.0
        %675 = vmatprep.subr.mxu0 0.0
        %676 = vmatpush1.msra.mxu0 0.0
        %677 = vmatprep.subr.mxu0 0.0
        %678 = vmatpush1.msra.mxu0 0.0
        %679 = vmatprep.subr.mxu0 0.0
        %680 = vmatpush1.msra.mxu0 0.0
        %681 = vmatprep.subr.mxu0 0.0
        %682 = vmatpush1.msra.mxu0 0.0
        %683 = vmatprep.subr.mxu0 0.0
        %684 = vmatpush1.msra.mxu0 0.0
        %685 = vmatprep.subr.mxu0 0.0
        %686 = vmatpush1.msra.mxu0 0.0
        %687 = vmatprep.subr.mxu0 0.0
        %688 = vmatpush1.msra.mxu0 0.0
        %689 = vmatprep.subr.mxu0 0.0
        %690 = vmatpush1.msra.mxu0 %v663
        %691 = vmatprep.subr.mxu0 0.0
        %692 = vmatpush1.msra.mxu0 %v646
        %693 = vmatprep.subr.mxu0 0.0
        %694 = vmatpush1.msra.mxu0 %v645
        %695 = vmatprep.subr.mxu0 0.0
        %696 = vmatpush1.msra.mxu0 %v644
        %697 = vmatprep.subr.mxu0 0.0
        %698 = vmatpush2.msra.mxu0 0.0
        %699 = vmatprep.subr.mxu0 0.0
        %700 = vmatpush2.msra.mxu0 0.0
        %701 = vmatprep.subr.mxu0 0.0
        %702 = vmatpush2.msra.mxu0 0.0
        %703 = vmatprep.subr.mxu0 0.0
        %704 = vmatpush2.msra.mxu0 0.0
        %705 = vmatprep.subr.mxu0 0.0
        %706 = vmatpush2.msra.mxu0 0.0
        %707 = vmatprep.subr.mxu0 0.0
        %708 = vmatpush2.msra.mxu0 0.0
        %709 = vmatprep.subr.mxu0 0.0
        %710 = vmatpush2.msra.mxu0 0.0
        %711 = vmatprep.subr.mxu0 0.0
        %712 = vmatpush2.msra.mxu0 0.0
        %713 = vmatprep.subr.mxu0 0.0
        %714 = vmatpush2.msra.mxu0 0.0
        %715 = vmatprep.subr.mxu0 0.0
        %716 = vmatpush2.msra.mxu0 0.0
        %717 = vmatprep.subr.mxu0 0.0
        %718 = vmatpush2.msra.mxu0 0.0
        %719 = vmatprep.subr.mxu0 0.0
        %720 = vmatpush2.msra.mxu0 0.0
        %721 = vmatprep.subr.mxu0 0.0
        %722 = vmatpush2.msra.mxu0 0.0
        %723 = vmatprep.subr.mxu0 0.0
        %724 = vmatpush2.msra.mxu0 0.0
        %725 = vmatprep.subr.mxu0 0.0
        %726 = vmatpush2.msra.mxu0 0.0
        %727 = vmatprep.subr.mxu0 0.0
        %728 = vmatpush2.msra.mxu0 0.0
        %729 = vmatprep.mubr.f32.mxu0 0.0
        %730 = vmatmul.mubr.f32.gmra.mxu0 %v656
        %v731 = vpop.f32.mrf.mxu0
        %v732 = vadd.f32 0.0, %v731
        %v733 = vpop.f32.mrf.mxu0
        %734 = vmatprep.mubr.f32.mxu0 0.0
        %735 = vmatmul.mubr.f32.gmra.mxu0 %v658
        %v736 = vpop.f32.mrf.mxu0
        %v737 = vadd.f32 0.0, %v736
        %v738 = vpop.f32.mrf.mxu0
        %739 = vmatprep.mubr.f32.mxu0 0.0
        %740 = vmatmul.mubr.f32.gmra.mxu0 %v660
        %v741 = vpop.f32.mrf.mxu0
        %v742 = vadd.f32 0.0, %v741
        %v743 = vpop.f32.mrf.mxu0
        %744 = vdwg.mxu0
        %v745 = vadd.f32 %v630, %v732
        %v746 = vadd.f32 %v635, %v737
        %v747 = vadd.f32 %v640, %v742
        %s748 = scalar_lea.vmem %s1, 96
        %v749 = vld [vmem:[%s748] sm:$0xff]
        %v750 = vld [vmem:[%s748 + $0x8] sm:$0xff]
        %v751 = vld [vmem:[%s748 + $0x10] sm:$0xff]
        %v752 = vld [vmem:[%s748 + $0x18] sm:$0xf]
        %vm753 = vcmask 1044480
        %v754 = vrot.slane %v438, 3
        %v755 = vrot.slane %v439, 3
        %v756 = vsel %vm753, %v754, %v755
        %v757 = vrot.slane %v440, 3
        %v758 = vsel %vm753, %v755, %v757
        %v759 = vrot.slane %v441, 3
        %v760 = vsel %vm753, %v757, %v759
        %v761 = vsel %vm463, %v756, 0
        %v763 = vsel %vm463, %v758, 0
        %v765 = vsel %vm463, %v760, 0
        %v768 = vsel %vm470, %v752, 0
        %770 = vmatprep.subr.mxu0 0.0
        %771 = vmatpush1.msra.mxu0 0.0
        %772 = vmatprep.subr.mxu0 0.0
        %773 = vmatpush1.msra.mxu0 0.0
        %774 = vmatprep.subr.mxu0 0.0
        %775 = vmatpush1.msra.mxu0 0.0
        %776 = vmatprep.subr.mxu0 0.0
        %777 = vmatpush1.msra.mxu0 0.0
        %778 = vmatprep.subr.mxu0 0.0
        %779 = vmatpush1.msra.mxu0 0.0
        %780 = vmatprep.subr.mxu0 0.0
        %781 = vmatpush1.msra.mxu0 0.0
        %782 = vmatprep.subr.mxu0 0.0
        %783 = vmatpush1.msra.mxu0 0.0
        %784 = vmatprep.subr.mxu0 0.0
        %785 = vmatpush1.msra.mxu0 0.0
        %786 = vmatprep.subr.mxu0 0.0
        %787 = vmatpush1.msra.mxu0 0.0
        %788 = vmatprep.subr.mxu0 0.0
        %789 = vmatpush1.msra.mxu0 0.0
        %790 = vmatprep.subr.mxu0 0.0
        %791 = vmatpush1.msra.mxu0 0.0
        %792 = vmatprep.subr.mxu0 0.0
        %793 = vmatpush1.msra.mxu0 0.0
        %794 = vmatprep.subr.mxu0 0.0
        %795 = vmatpush1.msra.mxu0 %v768
        %796 = vmatprep.subr.mxu0 0.0
        %797 = vmatpush1.msra.mxu0 %v751
        %798 = vmatprep.subr.mxu0 0.0
        %799 = vmatpush1.msra.mxu0 %v750
        %800 = vmatprep.subr.mxu0 0.0
        %801 = vmatpush1.msra.mxu0 %v749
        %802 = vmatprep.subr.mxu0 0.0
        %803 = vmatpush2.msra.mxu0 0.0
        %804 = vmatprep.subr.mxu0 0.0
        %805 = vmatpush2.msra.mxu0 0.0
        %806 = vmatprep.subr.mxu0 0.0
        %807 = vmatpush2.msra.mxu0 0.0
        %808 = vmatprep.subr.mxu0 0.0
        %809 = vmatpush2.msra.mxu0 0.0
        %810 = vmatprep.subr.mxu0 0.0
        %811 = vmatpush2.msra.mxu0 0.0
        %812 = vmatprep.subr.mxu0 0.0
        %813 = vmatpush2.msra.mxu0 0.0
        %814 = vmatprep.subr.mxu0 0.0
        %815 = vmatpush2.msra.mxu0 0.0
        %816 = vmatprep.subr.mxu0 0.0
        %817 = vmatpush2.msra.mxu0 0.0
        %818 = vmatprep.subr.mxu0 0.0
        %819 = vmatpush2.msra.mxu0 0.0
        %820 = vmatprep.subr.mxu0 0.0
        %821 = vmatpush2.msra.mxu0 0.0
        %822 = vmatprep.subr.mxu0 0.0
        %823 = vmatpush2.msra.mxu0 0.0
        %824 = vmatprep.subr.mxu0 0.0
        %825 = vmatpush2.msra.mxu0 0.0
        %826 = vmatprep.subr.mxu0 0.0
        %827 = vmatpush2.msra.mxu0 0.0
        %828 = vmatprep.subr.mxu0 0.0
        %829 = vmatpush2.msra.mxu0 0.0
        %830 = vmatprep.subr.mxu0 0.0
        %831 = vmatpush2.msra.mxu0 0.0
        %832 = vmatprep.subr.mxu0 0.0
        %833 = vmatpush2.msra.mxu0 0.0
        %834 = vmatprep.mubr.f32.mxu0 0.0
        %835 = vmatmul.mubr.f32.gmra.mxu0 %v761
        %v836 = vpop.f32.mrf.mxu0
        %v837 = vadd.f32 0.0, %v836
        %v838 = vpop.f32.mrf.mxu0
        %839 = vmatprep.mubr.f32.mxu0 0.0
        %840 = vmatmul.mubr.f32.gmra.mxu0 %v763
        %v841 = vpop.f32.mrf.mxu0
        %v842 = vadd.f32 0.0, %v841
        %v843 = vpop.f32.mrf.mxu0
        %844 = vmatprep.mubr.f32.mxu0 0.0
        %845 = vmatmul.mubr.f32.gmra.mxu0 %v765
        %v846 = vpop.f32.mrf.mxu0
        %v847 = vadd.f32 0.0, %v846
        %v848 = vpop.f32.mrf.mxu0
        %849 = vdwg.mxu0
        %v850 = vadd.f32 %v745, %v837
        %v851 = vadd.f32 %v746, %v842
        %v852 = vadd.f32 %v747, %v847
        %s853 = scalar_lea.vmem %s1, 128
        %v854 = vld [vmem:[%s853] sm:$0xff]
        %v855 = vld [vmem:[%s853 + $0x8] sm:$0xff]
        %v856 = vld [vmem:[%s853 + $0x10] sm:$0xff]
        %v857 = vld [vmem:[%s853 + $0x18] sm:$0xf]
        %v858 = vrot.slane %v438, 4
        %v859 = vrot.slane %v439, 4
        %v860 = vsel %vm470, %v858, %v859
        %v861 = vrot.slane %v440, 4
        %v862 = vsel %vm470, %v859, %v861
        %v863 = vrot.slane %v441, 4
        %v864 = vsel %vm470, %v861, %v863
        %v865 = vsel %vm463, %v860, 0
        %v867 = vsel %vm463, %v862, 0
        %v869 = vsel %vm463, %v864, 0
        %v872 = vsel %vm470, %v857, 0
        %874 = vmatprep.subr.mxu0 0.0
        %875 = vmatpush1.msra.mxu0 0.0
        %876 = vmatprep.subr.mxu0 0.0
        %877 = vmatpush1.msra.mxu0 0.0
        %878 = vmatprep.subr.mxu0 0.0
        %879 = vmatpush1.msra.mxu0 0.0
        %880 = vmatprep.subr.mxu0 0.0
        %881 = vmatpush1.msra.mxu0 0.0
        %882 = vmatprep.subr.mxu0 0.0
        %883 = vmatpush1.msra.mxu0 0.0
        %884 = vmatprep.subr.mxu0 0.0
        %885 = vmatpush1.msra.mxu0 0.0
        %886 = vmatprep.subr.mxu0 0.0
        %887 = vmatpush1.msra.mxu0 0.0
        %888 = vmatprep.subr.mxu0 0.0
        %889 = vmatpush1.msra.mxu0 0.0
        %890 = vmatprep.subr.mxu0 0.0
        %891 = vmatpush1.msra.mxu0 0.0
        %892 = vmatprep.subr.mxu0 0.0
        %893 = vmatpush1.msra.mxu0 0.0
        %894 = vmatprep.subr.mxu0 0.0
        %895 = vmatpush1.msra.mxu0 0.0
        %896 = vmatprep.subr.mxu0 0.0
        %897 = vmatpush1.msra.mxu0 0.0
        %898 = vmatprep.subr.mxu0 0.0
        %899 = vmatpush1.msra.mxu0 %v872
        %900 = vmatprep.subr.mxu0 0.0
        %901 = vmatpush1.msra.mxu0 %v856
        %902 = vmatprep.subr.mxu0 0.0
        %903 = vmatpush1.msra.mxu0 %v855
        %904 = vmatprep.subr.mxu0 0.0
        %905 = vmatpush1.msra.mxu0 %v854
        %906 = vmatprep.subr.mxu0 0.0
        %907 = vmatpush2.msra.mxu0 0.0
        %908 = vmatprep.subr.mxu0 0.0
        %909 = vmatpush2.msra.mxu0 0.0
        %910 = vmatprep.subr.mxu0 0.0
        %911 = vmatpush2.msra.mxu0 0.0
        %912 = vmatprep.subr.mxu0 0.0
        %913 = vmatpush2.msra.mxu0 0.0
        %914 = vmatprep.subr.mxu0 0.0
        %915 = vmatpush2.msra.mxu0 0.0
        %916 = vmatprep.subr.mxu0 0.0
        %917 = vmatpush2.msra.mxu0 0.0
        %918 = vmatprep.subr.mxu0 0.0
        %919 = vmatpush2.msra.mxu0 0.0
        %920 = vmatprep.subr.mxu0 0.0
        %921 = vmatpush2.msra.mxu0 0.0
        %922 = vmatprep.subr.mxu0 0.0
        %923 = vmatpush2.msra.mxu0 0.0
        %924 = vmatprep.subr.mxu0 0.0
        %925 = vmatpush2.msra.mxu0 0.0
        %926 = vmatprep.subr.mxu0 0.0
        %927 = vmatpush2.msra.mxu0 0.0
        %928 = vmatprep.subr.mxu0 0.0
        %929 = vmatpush2.msra.mxu0 0.0
        %930 = vmatprep.subr.mxu0 0.0
        %931 = vmatpush2.msra.mxu0 0.0
        %932 = vmatprep.subr.mxu0 0.0
        %933 = vmatpush2.msra.mxu0 0.0
        %934 = vmatprep.subr.mxu0 0.0
        %935 = vmatpush2.msra.mxu0 0.0
        %936 = vmatprep.subr.mxu0 0.0
        %937 = vmatpush2.msra.mxu0 0.0
        %938 = vmatprep.mubr.f32.mxu0 0.0
        %939 = vmatmul.mubr.f32.gmra.mxu0 %v865
        %v940 = vpop.f32.mrf.mxu0
        %v941 = vadd.f32 0.0, %v940
        %v942 = vpop.f32.mrf.mxu0
        %943 = vmatprep.mubr.f32.mxu0 0.0
        %944 = vmatmul.mubr.f32.gmra.mxu0 %v867
        %v945 = vpop.f32.mrf.mxu0
        %v946 = vadd.f32 0.0, %v945
        %v947 = vpop.f32.mrf.mxu0
        %948 = vmatprep.mubr.f32.mxu0 0.0
        %949 = vmatmul.mubr.f32.gmra.mxu0 %v869
        %v950 = vpop.f32.mrf.mxu0
        %v951 = vadd.f32 0.0, %v950
        %v952 = vpop.f32.mrf.mxu0
        %953 = vdwg.mxu0
        %v954 = vadd.f32 %v850, %v941
        %v955 = vadd.f32 %v851, %v946
        %v956 = vadd.f32 %v852, %v951
        %v957 = vld [vmem:[%s2] sm:$0x1]
        %v959 = vlaneseq
        %v960 = vshrl.u32 %v959, 7
        %v961 = vsub.s32 0, %v960
        %v962 = vrot.slane %v957, %v961
        %v964 = vadd.f32 %v954, %v962
        %v965 = vadd.f32 %v955, %v962
        %v966 = vadd.f32 %v956, %v962
        %v967 = vmax.f32 %v964, 0.0
        %v968 = vmax.f32 %v965, 0.0
        %v969 = vmax.f32 %v966, 0.0
        %v970 = vld [vmem:[%s3] sm:$0xff]
        %v971 = vld [vmem:[%s3 + $0x8] sm:$0xff]
        %v972 = vld [vmem:[%s3 + $0x10] sm:$0xff]
        %v973 = vld [vmem:[%s3 + $0x18] sm:$0xff]
        %v974 = vld [vmem:[%s3 + $0x20] sm:$0xff]
        %v975 = vld [vmem:[%s3 + $0x28] sm:$0xff]
        %vm976 = vcmask 392192
        %v978 = vsel %vm976, %v967, 0
        %v981 = vsel %vm976, %v968, 0
        %v984 = vsel %vm976, %v969, 0
        %986 = vmatprep.subr.mxu0 0.0
        %987 = vmatpush1.msra.mxu0 0.0
        %988 = vmatprep.subr.mxu0 0.0
        %989 = vmatpush1.msra.mxu0 0.0
        %990 = vmatprep.subr.mxu0 0.0
        %991 = vmatpush1.msra.mxu0 0.0
        %992 = vmatprep.subr.mxu0 0.0
        %993 = vmatpush1.msra.mxu0 0.0
        %994 = vmatprep.subr.mxu0 0.0
        %995 = vmatpush1.msra.mxu0 0.0
        %996 = vmatprep.subr.mxu0 0.0
        %997 = vmatpush1.msra.mxu0 0.0
        %998 = vmatprep.subr.mxu0 0.0
        %999 = vmatpush1.msra.mxu0 0.0
        %1000 = vmatprep.subr.mxu0 0.0
        %1001 = vmatpush1.msra.mxu0 0.0
        %1002 = vmatprep.subr.mxu0 0.0
        %1003 = vmatpush1.msra.mxu0 0.0
        %1004 = vmatprep.subr.mxu0 0.0
        %1005 = vmatpush1.msra.mxu0 0.0
        %1006 = vmatprep.subr.mxu0 0.0
        %1007 = vmatpush1.msra.mxu0 %v975
        %1008 = vmatprep.subr.mxu0 0.0
        %1009 = vmatpush1.msra.mxu0 %v974
        %1010 = vmatprep.subr.mxu0 0.0
        %1011 = vmatpush1.msra.mxu0 %v973
        %1012 = vmatprep.subr.mxu0 0.0
        %1013 = vmatpush1.msra.mxu0 %v972
        %1014 = vmatprep.subr.mxu0 0.0
        %1015 = vmatpush1.msra.mxu0 %v971
        %1016 = vmatprep.subr.mxu0 0.0
        %1017 = vmatpush1.msra.mxu0 %v970
        %1018 = vmatprep.subr.mxu0 0.0
        %1019 = vmatpush2.msra.mxu0 0.0
        %1020 = vmatprep.subr.mxu0 0.0
        %1021 = vmatpush2.msra.mxu0 0.0
        %1022 = vmatprep.subr.mxu0 0.0
        %1023 = vmatpush2.msra.mxu0 0.0
        %1024 = vmatprep.subr.mxu0 0.0
        %1025 = vmatpush2.msra.mxu0 0.0
        %1026 = vmatprep.subr.mxu0 0.0
        %1027 = vmatpush2.msra.mxu0 0.0
        %1028 = vmatprep.subr.mxu0 0.0
        %1029 = vmatpush2.msra.mxu0 0.0
        %1030 = vmatprep.subr.mxu0 0.0
        %1031 = vmatpush2.msra.mxu0 0.0
        %1032 = vmatprep.subr.mxu0 0.0
        %1033 = vmatpush2.msra.mxu0 0.0
        %1034 = vmatprep.subr.mxu0 0.0
        %1035 = vmatpush2.msra.mxu0 0.0
        %1036 = vmatprep.subr.mxu0 0.0
        %1037 = vmatpush2.msra.mxu0 0.0
        %1038 = vmatprep.subr.mxu0 0.0
        %1039 = vmatpush2.msra.mxu0 0.0
        %1040 = vmatprep.subr.mxu0 0.0
        %1041 = vmatpush2.msra.mxu0 0.0
        %1042 = vmatprep.subr.mxu0 0.0
        %1043 = vmatpush2.msra.mxu0 0.0
        %1044 = vmatprep.subr.mxu0 0.0
        %1045 = vmatpush2.msra.mxu0 0.0
        %1046 = vmatprep.subr.mxu0 0.0
        %1047 = vmatpush2.msra.mxu0 0.0
        %1048 = vmatprep.subr.mxu0 0.0
        %1049 = vmatpush2.msra.mxu0 0.0
        %1050 = vmatprep.mubr.f32.mxu0 0.0
        %1051 = vmatmul.mubr.f32.gmra.mxu0 %v978
        %v1052 = vpop.f32.mrf.mxu0
        %v1053 = vadd.f32 0.0, %v1052
        %v1054 = vpop.f32.mrf.mxu0
        %1055 = vmatprep.mubr.f32.mxu0 0.0
        %1056 = vmatmul.mubr.f32.gmra.mxu0 %v981
        %v1057 = vpop.f32.mrf.mxu0
        %v1058 = vadd.f32 0.0, %v1057
        %v1059 = vpop.f32.mrf.mxu0
        %1060 = vmatprep.mubr.f32.mxu0 0.0
        %1061 = vmatmul.mubr.f32.gmra.mxu0 %v984
        %v1062 = vpop.f32.mrf.mxu0
        %v1063 = vadd.f32 0.0, %v1062
        %v1064 = vpop.f32.mrf.mxu0
        %1065 = vdwg.mxu0
        %s1066 = scalar_lea.vmem %s3, 48
        %v1067 = vld [vmem:[%s1066] sm:$0xff]
        %v1068 = vld [vmem:[%s1066 + $0x8] sm:$0xff]
        %v1069 = vld [vmem:[%s1066 + $0x10] sm:$0xff]
        %v1070 = vld [vmem:[%s1066 + $0x18] sm:$0xff]
        %v1071 = vld [vmem:[%s1066 + $0x20] sm:$0xff]
        %v1072 = vld [vmem:[%s1066 + $0x28] sm:$0xff]
        %1073 = vmatprep.subr.mxu0 0.0
        %1074 = vmatpush1.msra.mxu0 0.0
        %1075 = vmatprep.subr.mxu0 0.0
        %1076 = vmatpush1.msra.mxu0 0.0
        %1077 = vmatprep.subr.mxu0 0.0
        %1078 = vmatpush1.msra.mxu0 0.0
        %1079 = vmatprep.subr.mxu0 0.0
        %1080 = vmatpush1.msra.mxu0 0.0
        %1081 = vmatprep.subr.mxu0 0.0
        %1082 = vmatpush1.msra.mxu0 0.0
        %1083 = vmatprep.subr.mxu0 0.0
        %1084 = vmatpush1.msra.mxu0 0.0
        %1085 = vmatprep.subr.mxu0 0.0
        %1086 = vmatpush1.msra.mxu0 0.0
        %1087 = vmatprep.subr.mxu0 0.0
        %1088 = vmatpush1.msra.mxu0 0.0
        %1089 = vmatprep.subr.mxu0 0.0
        %1090 = vmatpush1.msra.mxu0 0.0
        %1091 = vmatprep.subr.mxu0 0.0
        %1092 = vmatpush1.msra.mxu0 0.0
        %1093 = vmatprep.subr.mxu0 0.0
        %1094 = vmatpush1.msra.mxu0 %v1072
        %1095 = vmatprep.subr.mxu0 0.0
        %1096 = vmatpush1.msra.mxu0 %v1071
        %1097 = vmatprep.subr.mxu0 0.0
        %1098 = vmatpush1.msra.mxu0 %v1070
        %1099 = vmatprep.subr.mxu0 0.0
        %1100 = vmatpush1.msra.mxu0 %v1069
        %1101 = vmatprep.subr.mxu0 0.0
        %1102 = vmatpush1.msra.mxu0 %v1068
        %1103 = vmatprep.subr.mxu0 0.0
        %1104 = vmatpush1.msra.mxu0 %v1067
        %1105 = vmatprep.subr.mxu0 0.0
        %1106 = vmatpush2.msra.mxu0 0.0
        %1107 = vmatprep.subr.mxu0 0.0
        %1108 = vmatpush2.msra.mxu0 0.0
        %1109 = vmatprep.subr.mxu0 0.0
        %1110 = vmatpush2.msra.mxu0 0.0
        %1111 = vmatprep.subr.mxu0 0.0
        %1112 = vmatpush2.msra.mxu0 0.0
        %1113 = vmatprep.subr.mxu0 0.0
        %1114 = vmatpush2.msra.mxu0 0.0
        %1115 = vmatprep.subr.mxu0 0.0
        %1116 = vmatpush2.msra.mxu0 0.0
        %1117 = vmatprep.subr.mxu0 0.0
        %1118 = vmatpush2.msra.mxu0 0.0
        %1119 = vmatprep.subr.mxu0 0.0
        %1120 = vmatpush2.msra.mxu0 0.0
        %1121 = vmatprep.subr.mxu0 0.0
        %1122 = vmatpush2.msra.mxu0 0.0
        %1123 = vmatprep.subr.mxu0 0.0
        %1124 = vmatpush2.msra.mxu0 0.0
        %1125 = vmatprep.subr.mxu0 0.0
        %1126 = vmatpush2.msra.mxu0 0.0
        %1127 = vmatprep.subr.mxu0 0.0
        %1128 = vmatpush2.msra.mxu0 0.0
        %1129 = vmatprep.subr.mxu0 0.0
        %1130 = vmatpush2.msra.mxu0 0.0
        %1131 = vmatprep.subr.mxu0 0.0
        %1132 = vmatpush2.msra.mxu0 0.0
        %1133 = vmatprep.subr.mxu0 0.0
        %1134 = vmatpush2.msra.mxu0 0.0
        %1135 = vmatprep.subr.mxu0 0.0
        %1136 = vmatpush2.msra.mxu0 0.0
        %1137 = vmatprep.mubr.f32.mxu0 0.0
        %1138 = vmatmul.mubr.f32.gmra.mxu0 %v978
        %v1139 = vpop.f32.mrf.mxu0
        %v1140 = vadd.f32 0.0, %v1139
        %v1141 = vpop.f32.mrf.mxu0
        %1142 = vmatprep.mubr.f32.mxu0 0.0
        %1143 = vmatmul.mubr.f32.gmra.mxu0 %v981
        %v1144 = vpop.f32.mrf.mxu0
        %v1145 = vadd.f32 0.0, %v1144
        %v1146 = vpop.f32.mrf.mxu0
        %1147 = vmatprep.mubr.f32.mxu0 0.0
        %1148 = vmatmul.mubr.f32.gmra.mxu0 %v984
        %v1149 = vpop.f32.mrf.mxu0
        %v1150 = vadd.f32 0.0, %v1149
        %v1151 = vpop.f32.mrf.mxu0
        %1152 = vdwg.mxu0
        %v1153 = vmax.f32 %v1053, %v1140
        %v1154 = vmax.f32 %v1058, %v1145
        %v1155 = vmax.f32 %v1063, %v1150
        %v1156 = vld [vmem:[%s4] sm:$0xff]
        %v1157 = vld [vmem:[%s4 + $0x8] sm:$0xf]
        %vm1158 = vcmask 195584
        %v1160 = vsel %vm1158, %v1156, 0
        %v1163 = vsel %vm1158, %v1157, 0
        %1165 = vmatprep.subr.mxu0 0.0
        %1166 = vmatpush1.msra.mxu0 0.0
        %1167 = vmatprep.subr.mxu0 0.0
        %1168 = vmatpush1.msra.mxu0 0.0
        %1169 = vmatprep.subr.mxu0 0.0
        %1170 = vmatpush1.msra.mxu0 0.0
        %1171 = vmatprep.subr.mxu0 0.0
        %1172 = vmatpush1.msra.mxu0 0.0
        %1173 = vmatprep.subr.mxu0 0.0
        %1174 = vmatpush1.msra.mxu0 0.0
        %1175 = vmatprep.subr.mxu0 0.0
        %1176 = vmatpush1.msra.mxu0 0.0
        %1177 = vmatprep.subr.mxu0 0.0
        %1178 = vmatpush1.msra.mxu0 0.0
        %1179 = vmatprep.subr.mxu0 0.0
        %1180 = vmatpush1.msra.mxu0 0.0
        %1181 = vmatprep.subr.mxu0 0.0
        %1182 = vmatpush1.msra.mxu0 0.0
        %1183 = vmatprep.subr.mxu0 0.0
        %1184 = vmatpush1.msra.mxu0 0.0
        %1185 = vmatprep.subr.mxu0 0.0
        %1186 = vmatpush1.msra.mxu0 0.0
        %1187 = vmatprep.subr.mxu0 0.0
        %1188 = vmatpush1.msra.mxu0 0.0
        %1189 = vmatprep.subr.mxu0 0.0
        %1190 = vmatpush1.msra.mxu0 0.0
        %1191 = vmatprep.subr.mxu0 0.0
        %1192 = vmatpush1.msra.mxu0 %v1155
        %1193 = vmatprep.subr.mxu0 0.0
        %1194 = vmatpush1.msra.mxu0 %v1154
        %1195 = vmatprep.subr.mxu0 0.0
        %1196 = vmatpush1.msra.mxu0 %v1153
        %1197 = vmatprep.subr.mxu0 0.0
        %1198 = vmatpush2.msra.mxu0 0.0
        %1199 = vmatprep.subr.mxu0 0.0
        %1200 = vmatpush2.msra.mxu0 0.0
        %1201 = vmatprep.subr.mxu0 0.0
        %1202 = vmatpush2.msra.mxu0 0.0
        %1203 = vmatprep.subr.mxu0 0.0
        %1204 = vmatpush2.msra.mxu0 0.0
        %1205 = vmatprep.subr.mxu0 0.0
        %1206 = vmatpush2.msra.mxu0 0.0
        %1207 = vmatprep.subr.mxu0 0.0
        %1208 = vmatpush2.msra.mxu0 0.0
        %1209 = vmatprep.subr.mxu0 0.0
        %1210 = vmatpush2.msra.mxu0 0.0
        %1211 = vmatprep.subr.mxu0 0.0
        %1212 = vmatpush2.msra.mxu0 0.0
        %1213 = vmatprep.subr.mxu0 0.0
        %1214 = vmatpush2.msra.mxu0 0.0
        %1215 = vmatprep.subr.mxu0 0.0
        %1216 = vmatpush2.msra.mxu0 0.0
        %1217 = vmatprep.subr.mxu0 0.0
        %1218 = vmatpush2.msra.mxu0 0.0
        %1219 = vmatprep.subr.mxu0 0.0
        %1220 = vmatpush2.msra.mxu0 0.0
        %1221 = vmatprep.subr.mxu0 0.0
        %1222 = vmatpush2.msra.mxu0 0.0
        %1223 = vmatprep.subr.mxu0 0.0
        %1224 = vmatpush2.msra.mxu0 0.0
        %1225 = vmatprep.subr.mxu0 0.0
        %1226 = vmatpush2.msra.mxu0 0.0
        %1227 = vmatprep.subr.mxu0 0.0
        %1228 = vmatpush2.msra.mxu0 0.0
        %1229 = vmatprep.mubr.f32.mxu0 0.0
        %1230 = vmatmul.mubr.f32.gmra.mxu0 %v1160
        %v1231 = vpop.f32.mrf.mxu0
        %v1232 = vadd.f32 0.0, %v1231
        %v1233 = vpop.f32.mrf.mxu0
        %1234 = vmatprep.mubr.f32.mxu0 0.0
        %1235 = vmatmul.mubr.f32.gmra.mxu0 %v1163
        %v1236 = vpop.f32.mrf.mxu0
        %v1237 = vadd.f32 0.0, %v1236
        %v1238 = vpop.f32.mrf.mxu0
        %1239 = vdwg.mxu0
        %s1240 = scalar_lea.vmem %s4, 16
        %v1241 = vld [vmem:[%s1240] sm:$0xff]
        %v1242 = vld [vmem:[%s1240 + $0x8] sm:$0xf]
        %v1244 = vsel %vm1158, %v1241, 0
        %v1247 = vsel %vm1158, %v1242, 0
        %1249 = vmatprep.subr.mxu0 0.0
        %1250 = vmatpush1.msra.mxu0 0.0
        %1251 = vmatprep.subr.mxu0 0.0
        %1252 = vmatpush1.msra.mxu0 0.0
        %1253 = vmatprep.subr.mxu0 0.0
        %1254 = vmatpush1.msra.mxu0 0.0
        %1255 = vmatprep.subr.mxu0 0.0
        %1256 = vmatpush1.msra.mxu0 0.0
        %1257 = vmatprep.subr.mxu0 0.0
        %1258 = vmatpush1.msra.mxu0 0.0
        %1259 = vmatprep.subr.mxu0 0.0
        %1260 = vmatpush1.msra.mxu0 0.0
        %1261 = vmatprep.subr.mxu0 0.0
        %1262 = vmatpush1.msra.mxu0 0.0
        %1263 = vmatprep.subr.mxu0 0.0
        %1264 = vmatpush1.msra.mxu0 0.0
        %1265 = vmatprep.subr.mxu0 0.0
        %1266 = vmatpush1.msra.mxu0 0.0
        %1267 = vmatprep.subr.mxu0 0.0
        %1268 = vmatpush1.msra.mxu0 0.0
        %1269 = vmatprep.subr.mxu0 0.0
        %1270 = vmatpush1.msra.mxu0 0.0
        %1271 = vmatprep.subr.mxu0 0.0
        %1272 = vmatpush1.msra.mxu0 0.0
        %1273 = vmatprep.subr.mxu0 0.0
        %1274 = vmatpush1.msra.mxu0 0.0
        %1275 = vmatprep.subr.mxu0 0.0
        %1276 = vmatpush1.msra.mxu0 %v1155
        %1277 = vmatprep.subr.mxu0 0.0
        %1278 = vmatpush1.msra.mxu0 %v1154
        %1279 = vmatprep.subr.mxu0 0.0
        %1280 = vmatpush1.msra.mxu0 %v1153
        %1281 = vmatprep.subr.mxu0 0.0
        %1282 = vmatpush2.msra.mxu0 0.0
        %1283 = vmatprep.subr.mxu0 0.0
        %1284 = vmatpush2.msra.mxu0 0.0
        %1285 = vmatprep.subr.mxu0 0.0
        %1286 = vmatpush2.msra.mxu0 0.0
        %1287 = vmatprep.subr.mxu0 0.0
        %1288 = vmatpush2.msra.mxu0 0.0
        %1289 = vmatprep.subr.mxu0 0.0
        %1290 = vmatpush2.msra.mxu0 0.0
        %1291 = vmatprep.subr.mxu0 0.0
        %1292 = vmatpush2.msra.mxu0 0.0
        %1293 = vmatprep.subr.mxu0 0.0
        %1294 = vmatpush2.msra.mxu0 0.0
        %1295 = vmatprep.subr.mxu0 0.0
        %1296 = vmatpush2.msra.mxu0 0.0
        %1297 = vmatprep.subr.mxu0 0.0
        %1298 = vmatpush2.msra.mxu0 0.0
        %1299 = vmatprep.subr.mxu0 0.0
        %1300 = vmatpush2.msra.mxu0 0.0
        %1301 = vmatprep.subr.mxu0 0.0
        %1302 = vmatpush2.msra.mxu0 0.0
        %1303 = vmatprep.subr.mxu0 0.0
        %1304 = vmatpush2.msra.mxu0 0.0
        %1305 = vmatprep.subr.mxu0 0.0
        %1306 = vmatpush2.msra.mxu0 0.0
        %1307 = vmatprep.subr.mxu0 0.0
        %1308 = vmatpush2.msra.mxu0 0.0
        %1309 = vmatprep.subr.mxu0 0.0
        %1310 = vmatpush2.msra.mxu0 0.0
        %1311 = vmatprep.subr.mxu0 0.0
        %1312 = vmatpush2.msra.mxu0 0.0
        %1313 = vmatprep.mubr.f32.mxu0 0.0
        %1314 = vmatmul.mubr.f32.gmra.mxu0 %v1244
        %v1315 = vpop.f32.mrf.mxu0
        %v1316 = vadd.f32 0.0, %v1315
        %v1317 = vpop.f32.mrf.mxu0
        %1318 = vmatprep.mubr.f32.mxu0 0.0
        %1319 = vmatmul.mubr.f32.gmra.mxu0 %v1247
        %v1320 = vpop.f32.mrf.mxu0
        %v1321 = vadd.f32 0.0, %v1320
        %v1322 = vpop.f32.mrf.mxu0
        %1323 = vdwg.mxu0
        %v1324 = vmax.f32 %v1232, %v1316
        %v1325 = vmax.f32 %v1237, %v1321
        %v1326 = vld [vmem:[%s5] sm:$0xff]
        %v1327 = vld [vmem:[%s5 + $0x8] sm:$0xff]
        %v1328 = vld [vmem:[%s5 + $0x10] sm:$0xff]
        %s1329 = scalar_lea.vmem %s5, 24
        %v1330 = vld [vmem:[%s1329] sm:$0xff]
        %v1331 = vld [vmem:[%s1329 + $0x8] sm:$0xff]
        %v1332 = vld [vmem:[%s1329 + $0x10] sm:$0xff]
        %v1335 = vrot.slane %v1324, 1
        %v1336 = vrot.slane %v1325, 1
        %v1337 = vsel %vm455, %v1335, %v1336
        %v1338 = vsel %vm1158, %v1337, 0
        %1340 = vmatprep.subr.mxu0 0.0
        %1341 = vmatpush1.msra.mxu0 0.0
        %1342 = vmatprep.subr.mxu0 0.0
        %1343 = vmatpush1.msra.mxu0 0.0
        %1344 = vmatprep.subr.mxu0 0.0
        %1345 = vmatpush1.msra.mxu0 0.0
        %1346 = vmatprep.subr.mxu0 0.0
        %1347 = vmatpush1.msra.mxu0 0.0
        %1348 = vmatprep.subr.mxu0 0.0
        %1349 = vmatpush1.msra.mxu0 0.0
        %1350 = vmatprep.subr.mxu0 0.0
        %1351 = vmatpush1.msra.mxu0 0.0
        %1352 = vmatprep.subr.mxu0 0.0
        %1353 = vmatpush1.msra.mxu0 0.0
        %1354 = vmatprep.subr.mxu0 0.0
        %1355 = vmatpush1.msra.mxu0 0.0
        %1356 = vmatprep.subr.mxu0 0.0
        %1357 = vmatpush1.msra.mxu0 0.0
        %1358 = vmatprep.subr.mxu0 0.0
        %1359 = vmatpush1.msra.mxu0 0.0
        %1360 = vmatprep.subr.mxu0 0.0
        %1361 = vmatpush1.msra.mxu0 0.0
        %1362 = vmatprep.subr.mxu0 0.0
        %1363 = vmatpush1.msra.mxu0 0.0
        %1364 = vmatprep.subr.mxu0 0.0
        %1365 = vmatpush1.msra.mxu0 0.0
        %1366 = vmatprep.subr.mxu0 0.0
        %1367 = vmatpush1.msra.mxu0 %v1332
        %1368 = vmatprep.subr.mxu0 0.0
        %1369 = vmatpush1.msra.mxu0 %v1331
        %1370 = vmatprep.subr.mxu0 0.0
        %1371 = vmatpush1.msra.mxu0 %v1330
        %1372 = vmatprep.subr.mxu0 0.0
        %1373 = vmatpush2.msra.mxu0 0.0
        %1374 = vmatprep.subr.mxu0 0.0
        %1375 = vmatpush2.msra.mxu0 0.0
        %1376 = vmatprep.subr.mxu0 0.0
        %1377 = vmatpush2.msra.mxu0 0.0
        %1378 = vmatprep.subr.mxu0 0.0
        %1379 = vmatpush2.msra.mxu0 0.0
        %1380 = vmatprep.subr.mxu0 0.0
        %1381 = vmatpush2.msra.mxu0 0.0
        %1382 = vmatprep.subr.mxu0 0.0
        %1383 = vmatpush2.msra.mxu0 0.0
        %1384 = vmatprep.subr.mxu0 0.0
        %1385 = vmatpush2.msra.mxu0 0.0
        %1386 = vmatprep.subr.mxu0 0.0
        %1387 = vmatpush2.msra.mxu0 0.0
        %1388 = vmatprep.subr.mxu0 0.0
        %1389 = vmatpush2.msra.mxu0 0.0
        %1390 = vmatprep.subr.mxu0 0.0
        %1391 = vmatpush2.msra.mxu0 0.0
        %1392 = vmatprep.subr.mxu0 0.0
        %1393 = vmatpush2.msra.mxu0 0.0
        %1394 = vmatprep.subr.mxu0 0.0
        %1395 = vmatpush2.msra.mxu0 0.0
        %1396 = vmatprep.subr.mxu0 0.0
        %1397 = vmatpush2.msra.mxu0 0.0
        %1398 = vmatprep.subr.mxu0 0.0
        %1399 = vmatpush2.msra.mxu0 0.0
        %1400 = vmatprep.subr.mxu0 0.0
        %1401 = vmatpush2.msra.mxu0 0.0
        %1402 = vmatprep.subr.mxu0 0.0
        %1403 = vmatpush2.msra.mxu0 0.0
        %1404 = vmatprep.mubr.f32.mxu0 0.0
        %1405 = vmatmul.mubr.f32.gmra.mxu0 %v1338
        %v1406 = vpop.f32.mrf.mxu0
        %v1407 = vadd.f32 0.0, %v1406
        %v1408 = vpop.f32.mrf.mxu0
        %1409 = vdwg.mxu0
        %v1410 = vsel %vm1158, %v1324, 0
        %1412 = vmatprep.subr.mxu0 0.0
        %1413 = vmatpush1.msra.mxu0 0.0
        %1414 = vmatprep.subr.mxu0 0.0
        %1415 = vmatpush1.msra.mxu0 0.0
        %1416 = vmatprep.subr.mxu0 0.0
        %1417 = vmatpush1.msra.mxu0 0.0
        %1418 = vmatprep.subr.mxu0 0.0
        %1419 = vmatpush1.msra.mxu0 0.0
        %1420 = vmatprep.subr.mxu0 0.0
        %1421 = vmatpush1.msra.mxu0 0.0
        %1422 = vmatprep.subr.mxu0 0.0
        %1423 = vmatpush1.msra.mxu0 0.0
        %1424 = vmatprep.subr.mxu0 0.0
        %1425 = vmatpush1.msra.mxu0 0.0
        %1426 = vmatprep.subr.mxu0 0.0
        %1427 = vmatpush1.msra.mxu0 0.0
        %1428 = vmatprep.subr.mxu0 0.0
        %1429 = vmatpush1.msra.mxu0 0.0
        %1430 = vmatprep.subr.mxu0 0.0
        %1431 = vmatpush1.msra.mxu0 0.0
        %1432 = vmatprep.subr.mxu0 0.0
        %1433 = vmatpush1.msra.mxu0 0.0
        %1434 = vmatprep.subr.mxu0 0.0
        %1435 = vmatpush1.msra.mxu0 0.0
        %1436 = vmatprep.subr.mxu0 0.0
        %1437 = vmatpush1.msra.mxu0 0.0
        %1438 = vmatprep.subr.mxu0 0.0
        %1439 = vmatpush1.msra.mxu0 %v1328
        %1440 = vmatprep.subr.mxu0 0.0
        %1441 = vmatpush1.msra.mxu0 %v1327
        %1442 = vmatprep.subr.mxu0 0.0
        %1443 = vmatpush1.msra.mxu0 %v1326
        %1444 = vmatprep.subr.mxu0 0.0
        %1445 = vmatpush2.msra.mxu0 0.0
        %1446 = vmatprep.subr.mxu0 0.0
        %1447 = vmatpush2.msra.mxu0 0.0
        %1448 = vmatprep.subr.mxu0 0.0
        %1449 = vmatpush2.msra.mxu0 0.0
        %1450 = vmatprep.subr.mxu0 0.0
        %1451 = vmatpush2.msra.mxu0 0.0
        %1452 = vmatprep.subr.mxu0 0.0
        %1453 = vmatpush2.msra.mxu0 0.0
        %1454 = vmatprep.subr.mxu0 0.0
        %1455 = vmatpush2.msra.mxu0 0.0
        %1456 = vmatprep.subr.mxu0 0.0
        %1457 = vmatpush2.msra.mxu0 0.0
        %1458 = vmatprep.subr.mxu0 0.0
        %1459 = vmatpush2.msra.mxu0 0.0
        %1460 = vmatprep.subr.mxu0 0.0
        %1461 = vmatpush2.msra.mxu0 0.0
        %1462 = vmatprep.subr.mxu0 0.0
        %1463 = vmatpush2.msra.mxu0 0.0
        %1464 = vmatprep.subr.mxu0 0.0
        %1465 = vmatpush2.msra.mxu0 0.0
        %1466 = vmatprep.subr.mxu0 0.0
        %1467 = vmatpush2.msra.mxu0 0.0
        %1468 = vmatprep.subr.mxu0 0.0
        %1469 = vmatpush2.msra.mxu0 0.0
        %1470 = vmatprep.subr.mxu0 0.0
        %1471 = vmatpush2.msra.mxu0 0.0
        %1472 = vmatprep.subr.mxu0 0.0
        %1473 = vmatpush2.msra.mxu0 0.0
        %1474 = vmatprep.subr.mxu0 0.0
        %1475 = vmatpush2.msra.mxu0 0.0
        %1476 = vmatprep.mubr.f32.mxu0 0.0
        %1477 = vmatmul.mubr.f32.gmra.mxu0 %v1410
        %v1478 = vpop.f32.mrf.mxu0
        %v1479 = vadd.f32 %v1407, %v1478
        %v1480 = vpop.f32.mrf.mxu0
        %1481 = vdwg.mxu0
        %s1482 = scalar_lea.vmem %s5, 48
        %v1483 = vld [vmem:[%s1482] sm:$0xff]
        %v1484 = vld [vmem:[%s1482 + $0x8] sm:$0xff]
        %v1485 = vld [vmem:[%s1482 + $0x10] sm:$0xff]
        %v1486 = vrot.slane %v1324, 2
        %v1487 = vrot.slane %v1325, 2
        %v1488 = vsel %vm648, %v1486, %v1487
        %v1489 = vsel %vm1158, %v1488, 0
        %1491 = vmatprep.subr.mxu0 0.0
        %1492 = vmatpush1.msra.mxu0 0.0
        %1493 = vmatprep.subr.mxu0 0.0
        %1494 = vmatpush1.msra.mxu0 0.0
        %1495 = vmatprep.subr.mxu0 0.0
        %1496 = vmatpush1.msra.mxu0 0.0
        %1497 = vmatprep.subr.mxu0 0.0
        %1498 = vmatpush1.msra.mxu0 0.0
        %1499 = vmatprep.subr.mxu0 0.0
        %1500 = vmatpush1.msra.mxu0 0.0
        %1501 = vmatprep.subr.mxu0 0.0
        %1502 = vmatpush1.msra.mxu0 0.0
        %1503 = vmatprep.subr.mxu0 0.0
        %1504 = vmatpush1.msra.mxu0 0.0
        %1505 = vmatprep.subr.mxu0 0.0
        %1506 = vmatpush1.msra.mxu0 0.0
        %1507 = vmatprep.subr.mxu0 0.0
        %1508 = vmatpush1.msra.mxu0 0.0
        %1509 = vmatprep.subr.mxu0 0.0
        %1510 = vmatpush1.msra.mxu0 0.0
        %1511 = vmatprep.subr.mxu0 0.0
        %1512 = vmatpush1.msra.mxu0 0.0
        %1513 = vmatprep.subr.mxu0 0.0
        %1514 = vmatpush1.msra.mxu0 0.0
        %1515 = vmatprep.subr.mxu0 0.0
        %1516 = vmatpush1.msra.mxu0 0.0
        %1517 = vmatprep.subr.mxu0 0.0
        %1518 = vmatpush1.msra.mxu0 %v1485
        %1519 = vmatprep.subr.mxu0 0.0
        %1520 = vmatpush1.msra.mxu0 %v1484
        %1521 = vmatprep.subr.mxu0 0.0
        %1522 = vmatpush1.msra.mxu0 %v1483
        %1523 = vmatprep.subr.mxu0 0.0
        %1524 = vmatpush2.msra.mxu0 0.0
        %1525 = vmatprep.subr.mxu0 0.0
        %1526 = vmatpush2.msra.mxu0 0.0
        %1527 = vmatprep.subr.mxu0 0.0
        %1528 = vmatpush2.msra.mxu0 0.0
        %1529 = vmatprep.subr.mxu0 0.0
        %1530 = vmatpush2.msra.mxu0 0.0
        %1531 = vmatprep.subr.mxu0 0.0
        %1532 = vmatpush2.msra.mxu0 0.0
        %1533 = vmatprep.subr.mxu0 0.0
        %1534 = vmatpush2.msra.mxu0 0.0
        %1535 = vmatprep.subr.mxu0 0.0
        %1536 = vmatpush2.msra.mxu0 0.0
        %1537 = vmatprep.subr.mxu0 0.0
        %1538 = vmatpush2.msra.mxu0 0.0
        %1539 = vmatprep.subr.mxu0 0.0
        %1540 = vmatpush2.msra.mxu0 0.0
        %1541 = vmatprep.subr.mxu0 0.0
        %1542 = vmatpush2.msra.mxu0 0.0
        %1543 = vmatprep.subr.mxu0 0.0
        %1544 = vmatpush2.msra.mxu0 0.0
        %1545 = vmatprep.subr.mxu0 0.0
        %1546 = vmatpush2.msra.mxu0 0.0
        %1547 = vmatprep.subr.mxu0 0.0
        %1548 = vmatpush2.msra.mxu0 0.0
        %1549 = vmatprep.subr.mxu0 0.0
        %1550 = vmatpush2.msra.mxu0 0.0
        %1551 = vmatprep.subr.mxu0 0.0
        %1552 = vmatpush2.msra.mxu0 0.0
        %1553 = vmatprep.subr.mxu0 0.0
        %1554 = vmatpush2.msra.mxu0 0.0
        %1555 = vmatprep.mubr.f32.mxu0 0.0
        %1556 = vmatmul.mubr.f32.gmra.mxu0 %v1489
        %v1557 = vpop.f32.mrf.mxu0
        %v1558 = vadd.f32 0.0, %v1557
        %v1559 = vpop.f32.mrf.mxu0
        %1560 = vdwg.mxu0
        %v1561 = vadd.f32 %v1479, %v1558
        %s1562 = scalar_lea.vmem %s5, 72
        %v1563 = vld [vmem:[%s1562] sm:$0xff]
        %v1564 = vld [vmem:[%s1562 + $0x8] sm:$0xff]
        %v1565 = vld [vmem:[%s1562 + $0x10] sm:$0xff]
        %v1566 = vrot.slane %v1324, 3
        %v1567 = vrot.slane %v1325, 3
        %v1568 = vsel %vm753, %v1566, %v1567
        %v1569 = vsel %vm1158, %v1568, 0
        %1571 = vmatprep.subr.mxu0 0.0
        %1572 = vmatpush1.msra.mxu0 0.0
        %1573 = vmatprep.subr.mxu0 0.0
        %1574 = vmatpush1.msra.mxu0 0.0
        %1575 = vmatprep.subr.mxu0 0.0
        %1576 = vmatpush1.msra.mxu0 0.0
        %1577 = vmatprep.subr.mxu0 0.0
        %1578 = vmatpush1.msra.mxu0 0.0
        %1579 = vmatprep.subr.mxu0 0.0
        %1580 = vmatpush1.msra.mxu0 0.0
        %1581 = vmatprep.subr.mxu0 0.0
        %1582 = vmatpush1.msra.mxu0 0.0
        %1583 = vmatprep.subr.mxu0 0.0
        %1584 = vmatpush1.msra.mxu0 0.0
        %1585 = vmatprep.subr.mxu0 0.0
        %1586 = vmatpush1.msra.mxu0 0.0
        %1587 = vmatprep.subr.mxu0 0.0
        %1588 = vmatpush1.msra.mxu0 0.0
        %1589 = vmatprep.subr.mxu0 0.0
        %1590 = vmatpush1.msra.mxu0 0.0
        %1591 = vmatprep.subr.mxu0 0.0
        %1592 = vmatpush1.msra.mxu0 0.0
        %1593 = vmatprep.subr.mxu0 0.0
        %1594 = vmatpush1.msra.mxu0 0.0
        %1595 = vmatprep.subr.mxu0 0.0
        %1596 = vmatpush1.msra.mxu0 0.0
        %1597 = vmatprep.subr.mxu0 0.0
        %1598 = vmatpush1.msra.mxu0 %v1565
        %1599 = vmatprep.subr.mxu0 0.0
        %1600 = vmatpush1.msra.mxu0 %v1564
        %1601 = vmatprep.subr.mxu0 0.0
        %1602 = vmatpush1.msra.mxu0 %v1563
        %1603 = vmatprep.subr.mxu0 0.0
        %1604 = vmatpush2.msra.mxu0 0.0
        %1605 = vmatprep.subr.mxu0 0.0
        %1606 = vmatpush2.msra.mxu0 0.0
        %1607 = vmatprep.subr.mxu0 0.0
        %1608 = vmatpush2.msra.mxu0 0.0
        %1609 = vmatprep.subr.mxu0 0.0
        %1610 = vmatpush2.msra.mxu0 0.0
        %1611 = vmatprep.subr.mxu0 0.0
        %1612 = vmatpush2.msra.mxu0 0.0
        %1613 = vmatprep.subr.mxu0 0.0
        %1614 = vmatpush2.msra.mxu0 0.0
        %1615 = vmatprep.subr.mxu0 0.0
        %1616 = vmatpush2.msra.mxu0 0.0
        %1617 = vmatprep.subr.mxu0 0.0
        %1618 = vmatpush2.msra.mxu0 0.0
        %1619 = vmatprep.subr.mxu0 0.0
        %1620 = vmatpush2.msra.mxu0 0.0
        %1621 = vmatprep.subr.mxu0 0.0
        %1622 = vmatpush2.msra.mxu0 0.0
        %1623 = vmatprep.subr.mxu0 0.0
        %1624 = vmatpush2.msra.mxu0 0.0
        %1625 = vmatprep.subr.mxu0 0.0
        %1626 = vmatpush2.msra.mxu0 0.0
        %1627 = vmatprep.subr.mxu0 0.0
        %1628 = vmatpush2.msra.mxu0 0.0
        %1629 = vmatprep.subr.mxu0 0.0
        %1630 = vmatpush2.msra.mxu0 0.0
        %1631 = vmatprep.subr.mxu0 0.0
        %1632 = vmatpush2.msra.mxu0 0.0
        %1633 = vmatprep.subr.mxu0 0.0
        %1634 = vmatpush2.msra.mxu0 0.0
        %1635 = vmatprep.mubr.f32.mxu0 0.0
        %1636 = vmatmul.mubr.f32.gmra.mxu0 %v1569
        %v1637 = vpop.f32.mrf.mxu0
        %v1638 = vadd.f32 0.0, %v1637
        %v1639 = vpop.f32.mrf.mxu0
        %1640 = vdwg.mxu0
        %v1641 = vadd.f32 %v1561, %v1638
        %s1642 = scalar_lea.vmem %s5, 96
        %v1643 = vld [vmem:[%s1642] sm:$0xff]
        %v1644 = vld [vmem:[%s1642 + $0x8] sm:$0xff]
        %v1645 = vld [vmem:[%s1642 + $0x10] sm:$0xff]
        %v1646 = vrot.slane %v1324, 4
        %v1647 = vrot.slane %v1325, 4
        %v1648 = vsel %vm470, %v1646, %v1647
        %v1649 = vsel %vm1158, %v1648, 0
        %1651 = vmatprep.subr.mxu0 0.0
        %1652 = vmatpush1.msra.mxu0 0.0
        %1653 = vmatprep.subr.mxu0 0.0
        %1654 = vmatpush1.msra.mxu0 0.0
        %1655 = vmatprep.subr.mxu0 0.0
        %1656 = vmatpush1.msra.mxu0 0.0
        %1657 = vmatprep.subr.mxu0 0.0
        %1658 = vmatpush1.msra.mxu0 0.0
        %1659 = vmatprep.subr.mxu0 0.0
        %1660 = vmatpush1.msra.mxu0 0.0
        %1661 = vmatprep.subr.mxu0 0.0
        %1662 = vmatpush1.msra.mxu0 0.0
        %1663 = vmatprep.subr.mxu0 0.0
        %1664 = vmatpush1.msra.mxu0 0.0
        %1665 = vmatprep.subr.mxu0 0.0
        %1666 = vmatpush1.msra.mxu0 0.0
        %1667 = vmatprep.subr.mxu0 0.0
        %1668 = vmatpush1.msra.mxu0 0.0
        %1669 = vmatprep.subr.mxu0 0.0
        %1670 = vmatpush1.msra.mxu0 0.0
        %1671 = vmatprep.subr.mxu0 0.0
        %1672 = vmatpush1.msra.mxu0 0.0
        %1673 = vmatprep.subr.mxu0 0.0
        %1674 = vmatpush1.msra.mxu0 0.0
        %1675 = vmatprep.subr.mxu0 0.0
        %1676 = vmatpush1.msra.mxu0 0.0
        %1677 = vmatprep.subr.mxu0 0.0
        %1678 = vmatpush1.msra.mxu0 %v1645
        %1679 = vmatprep.subr.mxu0 0.0
        %1680 = vmatpush1.msra.mxu0 %v1644
        %1681 = vmatprep.subr.mxu0 0.0
        %1682 = vmatpush1.msra.mxu0 %v1643
        %1683 = vmatprep.subr.mxu0 0.0
        %1684 = vmatpush2.msra.mxu0 0.0
        %1685 = vmatprep.subr.mxu0 0.0
        %1686 = vmatpush2.msra.mxu0 0.0
        %1687 = vmatprep.subr.mxu0 0.0
        %1688 = vmatpush2.msra.mxu0 0.0
        %1689 = vmatprep.subr.mxu0 0.0
        %1690 = vmatpush2.msra.mxu0 0.0
        %1691 = vmatprep.subr.mxu0 0.0
        %1692 = vmatpush2.msra.mxu0 0.0
        %1693 = vmatprep.subr.mxu0 0.0
        %1694 = vmatpush2.msra.mxu0 0.0
        %1695 = vmatprep.subr.mxu0 0.0
        %1696 = vmatpush2.msra.mxu0 0.0
        %1697 = vmatprep.subr.mxu0 0.0
        %1698 = vmatpush2.msra.mxu0 0.0
        %1699 = vmatprep.subr.mxu0 0.0
        %1700 = vmatpush2.msra.mxu0 0.0
        %1701 = vmatprep.subr.mxu0 0.0
        %1702 = vmatpush2.msra.mxu0 0.0
        %1703 = vmatprep.subr.mxu0 0.0
        %1704 = vmatpush2.msra.mxu0 0.0
        %1705 = vmatprep.subr.mxu0 0.0
        %1706 = vmatpush2.msra.mxu0 0.0
        %1707 = vmatprep.subr.mxu0 0.0
        %1708 = vmatpush2.msra.mxu0 0.0
        %1709 = vmatprep.subr.mxu0 0.0
        %1710 = vmatpush2.msra.mxu0 0.0
        %1711 = vmatprep.subr.mxu0 0.0
        %1712 = vmatpush2.msra.mxu0 0.0
        %1713 = vmatprep.subr.mxu0 0.0
        %1714 = vmatpush2.msra.mxu0 0.0
        %1715 = vmatprep.mubr.f32.mxu0 0.0
        %1716 = vmatmul.mubr.f32.gmra.mxu0 %v1649
        %v1717 = vpop.f32.mrf.mxu0
        %v1718 = vadd.f32 0.0, %v1717
        %v1719 = vpop.f32.mrf.mxu0
        %1720 = vdwg.mxu0
        %v1721 = vadd.f32 %v1641, %v1718
        %v1722 = vld [vmem:[%s6] sm:$0x1]
        %v1724 = vlaneseq
        %v1725 = vshrl.u32 %v1724, 7
        %v1726 = vsub.s32 0, %v1725
        %v1727 = vrot.slane %v1722, %v1726
        %v1729 = vadd.f32 %v1721, %v1727
        %v1730 = vmax.f32 %v1729, 0.0
        %v1731 = vld [vmem:[%s7] sm:$0xff]
        %v1732 = vld [vmem:[%s7 + $0x8] sm:$0xff]
        %v1733 = vld [vmem:[%s7 + $0x10] sm:$0xff]
        %v1734 = vld [vmem:[%s7 + $0x18] sm:$0xff]
        %v1735 = vld [vmem:[%s7 + $0x20] sm:$0xff]
        %vm1736 = vcmask 326656
        %v1738 = vsel %vm1736, %v1730, 0
        %1740 = vmatprep.subr.mxu0 0.0
        %1741 = vmatpush1.msra.mxu0 0.0
        %1742 = vmatprep.subr.mxu0 0.0
        %1743 = vmatpush1.msra.mxu0 0.0
        %1744 = vmatprep.subr.mxu0 0.0
        %1745 = vmatpush1.msra.mxu0 0.0
        %1746 = vmatprep.subr.mxu0 0.0
        %1747 = vmatpush1.msra.mxu0 0.0
        %1748 = vmatprep.subr.mxu0 0.0
        %1749 = vmatpush1.msra.mxu0 0.0
        %1750 = vmatprep.subr.mxu0 0.0
        %1751 = vmatpush1.msra.mxu0 0.0
        %1752 = vmatprep.subr.mxu0 0.0
        %1753 = vmatpush1.msra.mxu0 0.0
        %1754 = vmatprep.subr.mxu0 0.0
        %1755 = vmatpush1.msra.mxu0 0.0
        %1756 = vmatprep.subr.mxu0 0.0
        %1757 = vmatpush1.msra.mxu0 0.0
        %1758 = vmatprep.subr.mxu0 0.0
        %1759 = vmatpush1.msra.mxu0 0.0
        %1760 = vmatprep.subr.mxu0 0.0
        %1761 = vmatpush1.msra.mxu0 0.0
        %1762 = vmatprep.subr.mxu0 0.0
        %1763 = vmatpush1.msra.mxu0 %v1735
        %1764 = vmatprep.subr.mxu0 0.0
        %1765 = vmatpush1.msra.mxu0 %v1734
        %1766 = vmatprep.subr.mxu0 0.0
        %1767 = vmatpush1.msra.mxu0 %v1733
        %1768 = vmatprep.subr.mxu0 0.0
        %1769 = vmatpush1.msra.mxu0 %v1732
        %1770 = vmatprep.subr.mxu0 0.0
        %1771 = vmatpush1.msra.mxu0 %v1731
        %1772 = vmatprep.subr.mxu0 0.0
        %1773 = vmatpush2.msra.mxu0 0.0
        %1774 = vmatprep.subr.mxu0 0.0
        %1775 = vmatpush2.msra.mxu0 0.0
        %1776 = vmatprep.subr.mxu0 0.0
        %1777 = vmatpush2.msra.mxu0 0.0
        %1778 = vmatprep.subr.mxu0 0.0
        %1779 = vmatpush2.msra.mxu0 0.0
        %1780 = vmatprep.subr.mxu0 0.0
        %1781 = vmatpush2.msra.mxu0 0.0
        %1782 = vmatprep.subr.mxu0 0.0
        %1783 = vmatpush2.msra.mxu0 0.0
        %1784 = vmatprep.subr.mxu0 0.0
        %1785 = vmatpush2.msra.mxu0 0.0
        %1786 = vmatprep.subr.mxu0 0.0
        %1787 = vmatpush2.msra.mxu0 0.0
        %1788 = vmatprep.subr.mxu0 0.0
        %1789 = vmatpush2.msra.mxu0 0.0
        %1790 = vmatprep.subr.mxu0 0.0
        %1791 = vmatpush2.msra.mxu0 0.0
        %1792 = vmatprep.subr.mxu0 0.0
        %1793 = vmatpush2.msra.mxu0 0.0
        %1794 = vmatprep.subr.mxu0 0.0
        %1795 = vmatpush2.msra.mxu0 0.0
        %1796 = vmatprep.subr.mxu0 0.0
        %1797 = vmatpush2.msra.mxu0 0.0
        %1798 = vmatprep.subr.mxu0 0.0
        %1799 = vmatpush2.msra.mxu0 0.0
        %1800 = vmatprep.subr.mxu0 0.0
        %1801 = vmatpush2.msra.mxu0 0.0
        %1802 = vmatprep.subr.mxu0 0.0
        %1803 = vmatpush2.msra.mxu0 0.0
        %1804 = vmatprep.mubr.f32.mxu0 0.0
        %1805 = vmatmul.mubr.f32.gmra.mxu0 %v1738
        %v1806 = vpop.f32.mrf.mxu0
        %v1807 = vadd.f32 0.0, %v1806
        %v1808 = vpop.f32.mrf.mxu0
        %1809 = vdwg.mxu0
        %s1810 = scalar_lea.vmem %s7, 40
        %v1811 = vld [vmem:[%s1810] sm:$0xff]
        %v1812 = vld [vmem:[%s1810 + $0x8] sm:$0xff]
        %v1813 = vld [vmem:[%s1810 + $0x10] sm:$0xff]
        %v1814 = vld [vmem:[%s1810 + $0x18] sm:$0xff]
        %v1815 = vld [vmem:[%s1810 + $0x20] sm:$0xff]
        %1816 = vmatprep.subr.mxu0 0.0
        %1817 = vmatpush1.msra.mxu0 0.0
        %1818 = vmatprep.subr.mxu0 0.0
        %1819 = vmatpush1.msra.mxu0 0.0
        %1820 = vmatprep.subr.mxu0 0.0
        %1821 = vmatpush1.msra.mxu0 0.0
        %1822 = vmatprep.subr.mxu0 0.0
        %1823 = vmatpush1.msra.mxu0 0.0
        %1824 = vmatprep.subr.mxu0 0.0
        %1825 = vmatpush1.msra.mxu0 0.0
        %1826 = vmatprep.subr.mxu0 0.0
        %1827 = vmatpush1.msra.mxu0 0.0
        %1828 = vmatprep.subr.mxu0 0.0
        %1829 = vmatpush1.msra.mxu0 0.0
        %1830 = vmatprep.subr.mxu0 0.0
        %1831 = vmatpush1.msra.mxu0 0.0
        %1832 = vmatprep.subr.mxu0 0.0
        %1833 = vmatpush1.msra.mxu0 0.0
        %1834 = vmatprep.subr.mxu0 0.0
        %1835 = vmatpush1.msra.mxu0 0.0
        %1836 = vmatprep.subr.mxu0 0.0
        %1837 = vmatpush1.msra.mxu0 0.0
        %1838 = vmatprep.subr.mxu0 0.0
        %1839 = vmatpush1.msra.mxu0 %v1815
        %1840 = vmatprep.subr.mxu0 0.0
        %1841 = vmatpush1.msra.mxu0 %v1814
        %1842 = vmatprep.subr.mxu0 0.0
        %1843 = vmatpush1.msra.mxu0 %v1813
        %1844 = vmatprep.subr.mxu0 0.0
        %1845 = vmatpush1.msra.mxu0 %v1812
        %1846 = vmatprep.subr.mxu0 0.0
        %1847 = vmatpush1.msra.mxu0 %v1811
        %1848 = vmatprep.subr.mxu0 0.0
        %1849 = vmatpush2.msra.mxu0 0.0
        %1850 = vmatprep.subr.mxu0 0.0
        %1851 = vmatpush2.msra.mxu0 0.0
        %1852 = vmatprep.subr.mxu0 0.0
        %1853 = vmatpush2.msra.mxu0 0.0
        %1854 = vmatprep.subr.mxu0 0.0
        %1855 = vmatpush2.msra.mxu0 0.0
        %1856 = vmatprep.subr.mxu0 0.0
        %1857 = vmatpush2.msra.mxu0 0.0
        %1858 = vmatprep.subr.mxu0 0.0
        %1859 = vmatpush2.msra.mxu0 0.0
        %1860 = vmatprep.subr.mxu0 0.0
        %1861 = vmatpush2.msra.mxu0 0.0
        %1862 = vmatprep.subr.mxu0 0.0
        %1863 = vmatpush2.msra.mxu0 0.0
        %1864 = vmatprep.subr.mxu0 0.0
        %1865 = vmatpush2.msra.mxu0 0.0
        %1866 = vmatprep.subr.mxu0 0.0
        %1867 = vmatpush2.msra.mxu0 0.0
        %1868 = vmatprep.subr.mxu0 0.0
        %1869 = vmatpush2.msra.mxu0 0.0
        %1870 = vmatprep.subr.mxu0 0.0
        %1871 = vmatpush2.msra.mxu0 0.0
        %1872 = vmatprep.subr.mxu0 0.0
        %1873 = vmatpush2.msra.mxu0 0.0
        %1874 = vmatprep.subr.mxu0 0.0
        %1875 = vmatpush2.msra.mxu0 0.0
        %1876 = vmatprep.subr.mxu0 0.0
        %1877 = vmatpush2.msra.mxu0 0.0
        %1878 = vmatprep.subr.mxu0 0.0
        %1879 = vmatpush2.msra.mxu0 0.0
        %1880 = vmatprep.mubr.f32.mxu0 0.0
        %1881 = vmatmul.mubr.f32.gmra.mxu0 %v1738
        %v1882 = vpop.f32.mrf.mxu0
        %v1883 = vadd.f32 0.0, %v1882
        %v1884 = vpop.f32.mrf.mxu0
        %1885 = vdwg.mxu0
        %v1886 = vmax.f32 %v1807, %v1883
        %v1887 = vld [vmem:[%s8] sm:$0xf]
        %vm1888 = vcmask 64512
        %v1890 = vsel %vm1888, %v1887, 0
        %1892 = vmatprep.subr.mxu0 0.0
        %1893 = vmatpush1.msra.mxu0 0.0
        %1894 = vmatprep.subr.mxu0 0.0
        %1895 = vmatpush1.msra.mxu0 0.0
        %1896 = vmatprep.subr.mxu0 0.0
        %1897 = vmatpush1.msra.mxu0 0.0
        %1898 = vmatprep.subr.mxu0 0.0
        %1899 = vmatpush1.msra.mxu0 0.0
        %1900 = vmatprep.subr.mxu0 0.0
        %1901 = vmatpush1.msra.mxu0 0.0
        %1902 = vmatprep.subr.mxu0 0.0
        %1903 = vmatpush1.msra.mxu0 0.0
        %1904 = vmatprep.subr.mxu0 0.0
        %1905 = vmatpush1.msra.mxu0 0.0
        %1906 = vmatprep.subr.mxu0 0.0
        %1907 = vmatpush1.msra.mxu0 0.0
        %1908 = vmatprep.subr.mxu0 0.0
        %1909 = vmatpush1.msra.mxu0 0.0
        %1910 = vmatprep.subr.mxu0 0.0
        %1911 = vmatpush1.msra.mxu0 0.0
        %1912 = vmatprep.subr.mxu0 0.0
        %1913 = vmatpush1.msra.mxu0 0.0
        %1914 = vmatprep.subr.mxu0 0.0
        %1915 = vmatpush1.msra.mxu0 0.0
        %1916 = vmatprep.subr.mxu0 0.0
        %1917 = vmatpush1.msra.mxu0 0.0
        %1918 = vmatprep.subr.mxu0 0.0
        %1919 = vmatpush1.msra.mxu0 0.0
        %1920 = vmatprep.subr.mxu0 0.0
        %1921 = vmatpush1.msra.mxu0 0.0
        %1922 = vmatprep.subr.mxu0 0.0
        %1923 = vmatpush1.msra.mxu0 %v1886
        %1924 = vmatprep.subr.mxu0 0.0
        %1925 = vmatpush2.msra.mxu0 0.0
        %1926 = vmatprep.subr.mxu0 0.0
        %1927 = vmatpush2.msra.mxu0 0.0
        %1928 = vmatprep.subr.mxu0 0.0
        %1929 = vmatpush2.msra.mxu0 0.0
        %1930 = vmatprep.subr.mxu0 0.0
        %1931 = vmatpush2.msra.mxu0 0.0
        %1932 = vmatprep.subr.mxu0 0.0
        %1933 = vmatpush2.msra.mxu0 0.0
        %1934 = vmatprep.subr.mxu0 0.0
        %1935 = vmatpush2.msra.mxu0 0.0
        %1936 = vmatprep.subr.mxu0 0.0
        %1937 = vmatpush2.msra.mxu0 0.0
        %1938 = vmatprep.subr.mxu0 0.0
        %1939 = vmatpush2.msra.mxu0 0.0
        %1940 = vmatprep.subr.mxu0 0.0
        %1941 = vmatpush2.msra.mxu0 0.0
        %1942 = vmatprep.subr.mxu0 0.0
        %1943 = vmatpush2.msra.mxu0 0.0
        %1944 = vmatprep.subr.mxu0 0.0
        %1945 = vmatpush2.msra.mxu0 0.0
        %1946 = vmatprep.subr.mxu0 0.0
        %1947 = vmatpush2.msra.mxu0 0.0
        %1948 = vmatprep.subr.mxu0 0.0
        %1949 = vmatpush2.msra.mxu0 0.0
        %1950 = vmatprep.subr.mxu0 0.0
        %1951 = vmatpush2.msra.mxu0 0.0
        %1952 = vmatprep.subr.mxu0 0.0
        %1953 = vmatpush2.msra.mxu0 0.0
        %1954 = vmatprep.subr.mxu0 0.0
        %1955 = vmatpush2.msra.mxu0 0.0
        %1956 = vmatprep.mubr.f32.mxu0 0.0
        %1957 = vmatmul.mubr.f32.gmra.mxu0 %v1890
        %v1958 = vpop.f32.mrf.mxu0
        %v1959 = vadd.f32 0.0, %v1958
        %v1960 = vpop.f32.mrf.mxu0
        %1961 = vdwg.mxu0
        %s1962 = scalar_lea.vmem %s8, 4
        %v1963 = vld [vmem:[%s1962] sm:$0xf]
        %v1965 = vsel %vm1888, %v1963, 0
        %1967 = vmatprep.subr.mxu0 0.0
        %1968 = vmatpush1.msra.mxu0 0.0
        %1969 = vmatprep.subr.mxu0 0.0
        %1970 = vmatpush1.msra.mxu0 0.0
        %1971 = vmatprep.subr.mxu0 0.0
        %1972 = vmatpush1.msra.mxu0 0.0
        %1973 = vmatprep.subr.mxu0 0.0
        %1974 = vmatpush1.msra.mxu0 0.0
        %1975 = vmatprep.subr.mxu0 0.0
        %1976 = vmatpush1.msra.mxu0 0.0
        %1977 = vmatprep.subr.mxu0 0.0
        %1978 = vmatpush1.msra.mxu0 0.0
        %1979 = vmatprep.subr.mxu0 0.0
        %1980 = vmatpush1.msra.mxu0 0.0
        %1981 = vmatprep.subr.mxu0 0.0
        %1982 = vmatpush1.msra.mxu0 0.0
        %1983 = vmatprep.subr.mxu0 0.0
        %1984 = vmatpush1.msra.mxu0 0.0
        %1985 = vmatprep.subr.mxu0 0.0
        %1986 = vmatpush1.msra.mxu0 0.0
        %1987 = vmatprep.subr.mxu0 0.0
        %1988 = vmatpush1.msra.mxu0 0.0
        %1989 = vmatprep.subr.mxu0 0.0
        %1990 = vmatpush1.msra.mxu0 0.0
        %1991 = vmatprep.subr.mxu0 0.0
        %1992 = vmatpush1.msra.mxu0 0.0
        %1993 = vmatprep.subr.mxu0 0.0
        %1994 = vmatpush1.msra.mxu0 0.0
        %1995 = vmatprep.subr.mxu0 0.0
        %1996 = vmatpush1.msra.mxu0 0.0
        %1997 = vmatprep.subr.mxu0 0.0
        %1998 = vmatpush1.msra.mxu0 %v1886
        %1999 = vmatprep.subr.mxu0 0.0
        %2000 = vmatpush2.msra.mxu0 0.0
        %2001 = vmatprep.subr.mxu0 0.0
        %2002 = vmatpush2.msra.mxu0 0.0
        %2003 = vmatprep.subr.mxu0 0.0
        %2004 = vmatpush2.msra.mxu0 0.0
        %2005 = vmatprep.subr.mxu0 0.0
        %2006 = vmatpush2.msra.mxu0 0.0
        %2007 = vmatprep.subr.mxu0 0.0
        %2008 = vmatpush2.msra.mxu0 0.0
        %2009 = vmatprep.subr.mxu0 0.0
        %2010 = vmatpush2.msra.mxu0 0.0
        %2011 = vmatprep.subr.mxu0 0.0
        %2012 = vmatpush2.msra.mxu0 0.0
        %2013 = vmatprep.subr.mxu0 0.0
        %2014 = vmatpush2.msra.mxu0 0.0
        %2015 = vmatprep.subr.mxu0 0.0
        %2016 = vmatpush2.msra.mxu0 0.0
        %2017 = vmatprep.subr.mxu0 0.0
        %2018 = vmatpush2.msra.mxu0 0.0
        %2019 = vmatprep.subr.mxu0 0.0
        %2020 = vmatpush2.msra.mxu0 0.0
        %2021 = vmatprep.subr.mxu0 0.0
        %2022 = vmatpush2.msra.mxu0 0.0
        %2023 = vmatprep.subr.mxu0 0.0
        %2024 = vmatpush2.msra.mxu0 0.0
        %2025 = vmatprep.subr.mxu0 0.0
        %2026 = vmatpush2.msra.mxu0 0.0
        %2027 = vmatprep.subr.mxu0 0.0
        %2028 = vmatpush2.msra.mxu0 0.0
        %2029 = vmatprep.subr.mxu0 0.0
        %2030 = vmatpush2.msra.mxu0 0.0
        %2031 = vmatprep.mubr.f32.mxu0 0.0
        %2032 = vmatmul.mubr.f32.gmra.mxu0 %v1965
        %v2033 = vpop.f32.mrf.mxu0
        %v2034 = vadd.f32 0.0, %v2033
        %v2035 = vpop.f32.mrf.mxu0
        %2036 = vdwg.mxu0
        %v2037 = vmax.f32 %v1959, %v2034
        %v2038 = vld [vmem:[%s9] sm:$0xff]
        %v2039 = vld [vmem:[%s9 + $0x8] sm:$0xff]
        %v2040 = vld [vmem:[%s9 + $0x10] sm:$0xff]
        %v2041 = vld [vmem:[%s9 + $0x18] sm:$0xff]
        %v2042 = vld [vmem:[%s9 + $0x20] sm:$0xff]
        %v2043 = vld [vmem:[%s9 + $0x28] sm:$0xff]
        %v2044 = vld [vmem:[%s9 + $0x30] sm:$0xff]
        %v2045 = vld [vmem:[%s9 + $0x38] sm:$0xff]
        %v2046 = vld [vmem:[%s9 + $0x40] sm:$0xf]
        %v2047 = vld [vmem:[%s9 + $0x48] sm:$0xf]
        %v2048 = vld [vmem:[%s9 + $0x50] sm:$0xf]
        %v2049 = vld [vmem:[%s9 + $0x58] sm:$0xf]
        %vm2050 = vcmask 162816
        %v2052 = vsel %vm2050, %v2037, 0
        %v2055 = vsel %vm470, %v2046, 0
        %v2058 = vsel %vm470, %v2047, 0
        %v2061 = vsel %vm470, %v2048, 0
        %v2064 = vsel %vm470, %v2049, 0
        %2066 = vmatprep.subr.mxu0 0.0
        %2067 = vmatpush1.msra.mxu0 0.0
        %2068 = vmatprep.subr.mxu0 0.0
        %2069 = vmatpush1.msra.mxu0 0.0
        %2070 = vmatprep.subr.mxu0 0.0
        %2071 = vmatpush1.msra.mxu0 0.0
        %2072 = vmatprep.subr.mxu0 0.0
        %2073 = vmatpush1.msra.mxu0 0.0
        %2074 = vmatprep.subr.mxu0 0.0
        %2075 = vmatpush1.msra.mxu0 0.0
        %2076 = vmatprep.subr.mxu0 0.0
        %2077 = vmatpush1.msra.mxu0 0.0
        %2078 = vmatprep.subr.mxu0 0.0
        %2079 = vmatpush1.msra.mxu0 0.0
        %2080 = vmatprep.subr.mxu0 0.0
        %2081 = vmatpush1.msra.mxu0 0.0
        %2082 = vmatprep.subr.mxu0 0.0
        %2083 = vmatpush1.msra.mxu0 0.0
        %2084 = vmatprep.subr.mxu0 0.0
        %2085 = vmatpush1.msra.mxu0 0.0
        %2086 = vmatprep.subr.mxu0 0.0
        %2087 = vmatpush1.msra.mxu0 0.0
        %2088 = vmatprep.subr.mxu0 0.0
        %2089 = vmatpush1.msra.mxu0 0.0
        %2090 = vmatprep.subr.mxu0 0.0
        %2091 = vmatpush1.msra.mxu0 0.0
        %2092 = vmatprep.subr.mxu0 %v2058
        %2093 = vmatpush1.msra.mxu0 %v2055
        %2094 = vmatprep.subr.mxu0 %v2043
        %2095 = vmatpush1.msra.mxu0 %v2042
        %2096 = vmatprep.subr.mxu0 %v2039
        %2097 = vmatpush1.msra.mxu0 %v2038
        %2098 = vmatprep.subr.mxu0 0.0
        %2099 = vmatpush2.msra.mxu0 0.0
        %2100 = vmatprep.subr.mxu0 0.0
        %2101 = vmatpush2.msra.mxu0 0.0
        %2102 = vmatprep.subr.mxu0 0.0
        %2103 = vmatpush2.msra.mxu0 0.0
        %2104 = vmatprep.subr.mxu0 0.0
        %2105 = vmatpush2.msra.mxu0 0.0
        %2106 = vmatprep.subr.mxu0 0.0
        %2107 = vmatpush2.msra.mxu0 0.0
        %2108 = vmatprep.subr.mxu0 0.0
        %2109 = vmatpush2.msra.mxu0 0.0
        %2110 = vmatprep.subr.mxu0 0.0
        %2111 = vmatpush2.msra.mxu0 0.0
        %2112 = vmatprep.subr.mxu0 0.0
        %2113 = vmatpush2.msra.mxu0 0.0
        %2114 = vmatprep.subr.mxu0 0.0
        %2115 = vmatpush2.msra.mxu0 0.0
        %2116 = vmatprep.subr.mxu0 0.0
        %2117 = vmatpush2.msra.mxu0 0.0
        %2118 = vmatprep.subr.mxu0 0.0
        %2119 = vmatpush2.msra.mxu0 0.0
        %2120 = vmatprep.subr.mxu0 0.0
        %2121 = vmatpush2.msra.mxu0 0.0
        %2122 = vmatprep.subr.mxu0 0.0
        %2123 = vmatpush2.msra.mxu0 0.0
        %2124 = vmatprep.subr.mxu0 0.0
        %2125 = vmatpush2.msra.mxu0 0.0
        %2126 = vmatprep.subr.mxu0 0.0
        %2127 = vmatpush2.msra.mxu0 0.0
        %2128 = vmatprep.subr.mxu0 0.0
        %2129 = vmatpush2.msra.mxu0 0.0
        %2130 = vmatprep.mubr.f32.mxu0 0.0
        %2131 = vmatmul.mubr.f32.gmra.mxu0 %v2052
        %v2132 = vpop.f32.mrf.mxu0
        %v2133 = vadd.f32 0.0, %v2132
        %v2134 = vpop.f32.mrf.mxu0
        %v2135 = vadd.f32 0.0, %v2134
        %2136 = vdwg.mxu0
        %2137 = vmatprep.subr.mxu0 0.0
        %2138 = vmatpush1.msra.mxu0 0.0
        %2139 = vmatprep.subr.mxu0 0.0
        %2140 = vmatpush1.msra.mxu0 0.0
        %2141 = vmatprep.subr.mxu0 0.0
        %2142 = vmatpush1.msra.mxu0 0.0
        %2143 = vmatprep.subr.mxu0 0.0
        %2144 = vmatpush1.msra.mxu0 0.0
        %2145 = vmatprep.subr.mxu0 0.0
        %2146 = vmatpush1.msra.mxu0 0.0
        %2147 = vmatprep.subr.mxu0 0.0
        %2148 = vmatpush1.msra.mxu0 0.0
        %2149 = vmatprep.subr.mxu0 0.0
        %2150 = vmatpush1.msra.mxu0 0.0
        %2151 = vmatprep.subr.mxu0 0.0
        %2152 = vmatpush1.msra.mxu0 0.0
        %2153 = vmatprep.subr.mxu0 0.0
        %2154 = vmatpush1.msra.mxu0 0.0
        %2155 = vmatprep.subr.mxu0 0.0
        %2156 = vmatpush1.msra.mxu0 0.0
        %2157 = vmatprep.subr.mxu0 0.0
        %2158 = vmatpush1.msra.mxu0 0.0
        %2159 = vmatprep.subr.mxu0 0.0
        %2160 = vmatpush1.msra.mxu0 0.0
        %2161 = vmatprep.subr.mxu0 0.0
        %2162 = vmatpush1.msra.mxu0 0.0
        %2163 = vmatprep.subr.mxu0 %v2064
        %2164 = vmatpush1.msra.mxu0 %v2061
        %2165 = vmatprep.subr.mxu0 %v2045
        %2166 = vmatpush1.msra.mxu0 %v2044
        %2167 = vmatprep.subr.mxu0 %v2041
        %2168 = vmatpush1.msra.mxu0 %v2040
        %2169 = vmatprep.subr.mxu0 0.0
        %2170 = vmatpush2.msra.mxu0 0.0
        %2171 = vmatprep.subr.mxu0 0.0
        %2172 = vmatpush2.msra.mxu0 0.0
        %2173 = vmatprep.subr.mxu0 0.0
        %2174 = vmatpush2.msra.mxu0 0.0
        %2175 = vmatprep.subr.mxu0 0.0
        %2176 = vmatpush2.msra.mxu0 0.0
        %2177 = vmatprep.subr.mxu0 0.0
        %2178 = vmatpush2.msra.mxu0 0.0
        %2179 = vmatprep.subr.mxu0 0.0
        %2180 = vmatpush2.msra.mxu0 0.0
        %2181 = vmatprep.subr.mxu0 0.0
        %2182 = vmatpush2.msra.mxu0 0.0
        %2183 = vmatprep.subr.mxu0 0.0
        %2184 = vmatpush2.msra.mxu0 0.0
        %2185 = vmatprep.subr.mxu0 0.0
        %2186 = vmatpush2.msra.mxu0 0.0
        %2187 = vmatprep.subr.mxu0 0.0
        %2188 = vmatpush2.msra.mxu0 0.0
        %2189 = vmatprep.subr.mxu0 0.0
        %2190 = vmatpush2.msra.mxu0 0.0
        %2191 = vmatprep.subr.mxu0 0.0
        %2192 = vmatpush2.msra.mxu0 0.0
        %2193 = vmatprep.subr.mxu0 0.0
        %2194 = vmatpush2.msra.mxu0 0.0
        %2195 = vmatprep.subr.mxu0 0.0
        %2196 = vmatpush2.msra.mxu0 0.0
        %2197 = vmatprep.subr.mxu0 0.0
        %2198 = vmatpush2.msra.mxu0 0.0
        %2199 = vmatprep.subr.mxu0 0.0
        %2200 = vmatpush2.msra.mxu0 0.0
        %2201 = vmatprep.mubr.f32.mxu0 0.0
        %2202 = vmatmul.mubr.f32.gmra.mxu0 %v2052
        %v2203 = vpop.f32.mrf.mxu0
        %v2204 = vadd.f32 0.0, %v2203
        %v2205 = vpop.f32.mrf.mxu0
        %v2206 = vadd.f32 0.0, %v2205
        %2207 = vdwg.mxu0
        %v2209 = vrot.slane %v2135, 1
        %v2211 = vadd.f32 %v2133, %v2209
        %v2213 = vrot.slane %v2204, 2
        %v2215 = vadd.f32 %v2211, %v2213
        %v2217 = vrot.slane %v2206, 3
        %v2219 = vadd.f32 %v2215, %v2217
        %v2220 = vld [vmem:[%s10] sm:$0x1]
        %v2221 = vadd.f32 %v2219, %v2220
        %v2222 = vmax.f32 %v2221, 0.0
        %v2223 = vld [vmem:[%s11] sm:$0xff]
        %v2224 = vld [vmem:[%s11 + $0x8] sm:$0xff]
        %v2225 = vld [vmem:[%s11 + $0x10] sm:$0xff]
        %v2226 = vld [vmem:[%s11 + $0x18] sm:$0xff]
        %v2227 = vld [vmem:[%s11 + $0x20] sm:$0xff]
        %v2228 = vld [vmem:[%s11 + $0x28] sm:$0xff]
        %v2229 = vld [vmem:[%s11 + $0x30] sm:$0x3]
        %v2230 = vld [vmem:[%s12] sm:$0x1]
        %vm2231 = vcmask 408576
        %v2233 = vsel %vm2231, %v2222, 0
        %vm2235 = vcmask 1041408
        %v2237 = vsel %vm2235, %v2229, 0
        %2239 = vmatprep.subr.mxu0 0.0
        %2240 = vmatpush1.msra.mxu0 0.0
        %2241 = vmatprep.subr.mxu0 0.0
        %2242 = vmatpush1.msra.mxu0 0.0
        %2243 = vmatprep.subr.mxu0 0.0
        %2244 = vmatpush1.msra.mxu0 0.0
        %2245 = vmatprep.subr.mxu0 0.0
        %2246 = vmatpush1.msra.mxu0 0.0
        %2247 = vmatprep.subr.mxu0 0.0
        %2248 = vmatpush1.msra.mxu0 0.0
        %2249 = vmatprep.subr.mxu0 0.0
        %2250 = vmatpush1.msra.mxu0 0.0
        %2251 = vmatprep.subr.mxu0 0.0
        %2252 = vmatpush1.msra.mxu0 0.0
        %2253 = vmatprep.subr.mxu0 0.0
        %2254 = vmatpush1.msra.mxu0 0.0
        %2255 = vmatprep.subr.mxu0 0.0
        %2256 = vmatpush1.msra.mxu0 0.0
        %2257 = vmatprep.subr.mxu0 0.0
        %2258 = vmatpush1.msra.mxu0 %v2237
        %2259 = vmatprep.subr.mxu0 0.0
        %2260 = vmatpush1.msra.mxu0 %v2228
        %2261 = vmatprep.subr.mxu0 0.0
        %2262 = vmatpush1.msra.mxu0 %v2227
        %2263 = vmatprep.subr.mxu0 0.0
        %2264 = vmatpush1.msra.mxu0 %v2226
        %2265 = vmatprep.subr.mxu0 0.0
        %2266 = vmatpush1.msra.mxu0 %v2225
        %2267 = vmatprep.subr.mxu0 0.0
        %2268 = vmatpush1.msra.mxu0 %v2224
        %2269 = vmatprep.subr.mxu0 0.0
        %2270 = vmatpush1.msra.mxu0 %v2223
        %2271 = vmatprep.subr.mxu0 0.0
        %2272 = vmatpush2.msra.mxu0 0.0
        %2273 = vmatprep.subr.mxu0 0.0
        %2274 = vmatpush2.msra.mxu0 0.0
        %2275 = vmatprep.subr.mxu0 0.0
        %2276 = vmatpush2.msra.mxu0 0.0
        %2277 = vmatprep.subr.mxu0 0.0
        %2278 = vmatpush2.msra.mxu0 0.0
        %2279 = vmatprep.subr.mxu0 0.0
        %2280 = vmatpush2.msra.mxu0 0.0
        %2281 = vmatprep.subr.mxu0 0.0
        %2282 = vmatpush2.msra.mxu0 0.0
        %2283 = vmatprep.subr.mxu0 0.0
        %2284 = vmatpush2.msra.mxu0 0.0
        %2285 = vmatprep.subr.mxu0 0.0
        %2286 = vmatpush2.msra.mxu0 0.0
        %2287 = vmatprep.subr.mxu0 0.0
        %2288 = vmatpush2.msra.mxu0 0.0
        %2289 = vmatprep.subr.mxu0 0.0
        %2290 = vmatpush2.msra.mxu0 0.0
        %2291 = vmatprep.subr.mxu0 0.0
        %2292 = vmatpush2.msra.mxu0 0.0
        %2293 = vmatprep.subr.mxu0 0.0
        %2294 = vmatpush2.msra.mxu0 0.0
        %2295 = vmatprep.subr.mxu0 0.0
        %2296 = vmatpush2.msra.mxu0 0.0
        %2297 = vmatprep.subr.mxu0 0.0
        %2298 = vmatpush2.msra.mxu0 0.0
        %2299 = vmatprep.subr.mxu0 0.0
        %2300 = vmatpush2.msra.mxu0 0.0
        %2301 = vmatprep.subr.mxu0 0.0
        %2302 = vmatpush2.msra.mxu0 0.0
        %2303 = vmatprep.mubr.f32.mxu0 0.0
        %2304 = vmatmul.mubr.f32.gmra.mxu0 %v2233
        %v2305 = vpop.f32.mrf.mxu0
        %v2306 = vadd.f32 %v2230, %v2305
        %v2307 = vpop.f32.mrf.mxu0
        %2308 = vdwg.mxu0
        %vm2309 = vcmask 73728
        %2310 = vst.msk [vmem:[%s432] sm:$0x1] %vm2309, %v2306
        %s2311 = sand.u32 %s313, 1
        %s2312 = scalar_lea.sflag [#allocation3], %s2311
        %s2313 = sand.u32 %s313, 1
        %s2314 = scalar_lea.vmem [#allocation2], %s2313
        // Predicated region
        $region73: #{net_forward.1} parent=71 // pred_check
          %p2315 = pneg %p323
        $region74: #{net_forward.1} parent=71 // pred_check_branch
          %2317 = sbr.rel (%p2315) target = $region76
        $region75: #{net_forward.1} parent=71 // pred_region
          %s2319 = ssub.s32 16, 16
          %2320 = vsyncadd %s2312, %s2319
          %s2321 = smul.addr %s27, 16
          %s2322 = scalar_lea.hbm %s13, %s2321
          %s2324 = sshll.u32 %s2314, 4
          %s2325 = int_to_ptr.vmem [resolvable:$true] %s2324
          %2327 = dma.vmem_to_hbm [thread:$0]  %s2325, 16, %s2322, %s2312
        $region76: #{net_forward.1} parent=71 // pred_fallthru
          _
      $region72: #{net_forward.1} parent=5 // pred_fallthru
        _
      %p2328 = scmp.le.s32.totalorder 2, %s22
      // Predicated region
      $region77: #{net_forward.1} parent=5 // pred_check
        %p2329 = pneg %p2328
      $region78: #{net_forward.1} parent=5 // pred_check_branch
        %2331 = sbr.rel (%p2329) target = $region80
      $region79: #{net_forward.1} parent=5 // pred_region
        %s2332 = ssub.s32 %s22, 2
        // Predicated region
        $region81: #{net_forward.1} parent=79 // pred_check
          %p2333 = pneg %p329
        $region82: #{net_forward.1} parent=79 // pred_check_branch
          %2335 = sbr.rel (%p2333) target = $region84
        $region83: #{net_forward.1} parent=79 // pred_region
          %s2336 = sand.u32 %s314, 1
          %s2337 = scalar_lea.sflag [#allocation3], %s2336
          %s2338 = sand.u32 %s314, 1
          %s2339 = scalar_lea.vmem [#allocation2], %s2338
          %2340 = dma.done %s2337, 16
        $region84: #{net_forward.1} parent=79 // pred_fallthru
          _
      $region80: #{net_forward.1} parent=5 // pred_fallthru
        _
    $region6: #{net_forward.1} parent=1 // loop_footer
      %s26 = sadd.s32 1, %s22
    $region7: #{net_forward.1} parent=1 // loop_footer_branch
      %21 = sbr.rel target = $region3
    $region8: #{net_forward.1} parent=1 // loop_exit
      _
    %2341 = vsyncpa [#allocation3], 1
    %s2342 = scalar_lea.sflag [#allocation3], 1
    %2343 = vsyncpa %s2342, 1

</llo_original>
